<compile_context>
chip_gen: v7x
topology: tpu7x:2x2x1
jax: 0.10.0
libtpu: 0.0.40
codegen_flags: <defaults>
</compile_context>

<pallas_src>
import jax
import jax.numpy as jnp
from jax.experimental import pallas as pl
from jax.experimental.pallas import tpu as pltpu

INPUT_SIZE = 3072
HIDDEN_SIZE = 128


def _round_up(n, m):
    return ((n + m - 1) // m) * m


def mlp_kernel(x_ref, w1_ref, b1_ref, w2_ref, b2_ref, w3_ref, b3_ref,
               wp_ref, bp_ref, out_ref):
    x = x_ref[...]                                   # (TB, INPUT_SIZE) f32

    # fc + ReLU
    h = jnp.dot(x, w1_ref[...], preferred_element_type=jnp.float32) + b1_ref[...]
    h = jnp.maximum(h, 0.0)

    # fc2 + ReLU
    h = jnp.dot(h, w2_ref[...], preferred_element_type=jnp.float32) + b2_ref[...]
    h = jnp.maximum(h, 0.0)

    # fc3 + ReLU
    h = jnp.dot(h, w3_ref[...], preferred_element_type=jnp.float32) + b3_ref[...]
    h = jnp.maximum(h, 0.0)

    # predict: (TB, H) x (1, H) lane reduction (avoids an N=1 MXU matmul).
    out = jnp.sum(h * wp_ref[...], axis=-1, keepdims=True) + bp_ref[...]   # (TB, 1)
    out_ref[...] = out.astype(out_ref.dtype)


def nn_forward(x, params, *, block_b=512):
    """x: (B, INPUT_SIZE) f32. params dict (see init_params). Returns (B, 1) f32."""
    w1, b1 = params["w1"], params["b1"]
    w2, b2 = params["w2"], params["b2"]
    w3, b3 = params["w3"], params["b3"]
    wp, bp = params["wp"], params["bp"]            # wp: (1, H), bp: (1, 1)

    B = x.shape[0]
    # Batch tile: multiple of 128 for full MXU rows when the batch is large,
    # multiple of 8 (sublane) for tiny batches. Capped at block_b.
    tb = min(block_b, _round_up(B, 8 if B < 128 else 128))
    B_pad = _round_up(B, tb)
    if B_pad != B:
        x = jnp.pad(x, ((0, B_pad - B), (0, 0)))

    grid = (B_pad // tb,)

    # Weights/biases: full block, constant index -> DMA'd once, resident in VMEM.
    resident = lambda a: pl.BlockSpec(a.shape, lambda i: (0, 0))

    out = pl.pallas_call(
        mlp_kernel,
        out_shape=jax.ShapeDtypeStruct((B_pad, 1), jnp.float32),
        grid=grid,
        in_specs=[
            pl.BlockSpec((tb, INPUT_SIZE), lambda i: (i, 0)),   # x: streamed per tile
            resident(w1), resident(b1),
            resident(w2), resident(b2),
            resident(w3), resident(b3),
            resident(wp), resident(bp),
        ],
        out_specs=pl.BlockSpec((tb, 1), lambda i: (i, 0)),
        compiler_params=pltpu.CompilerParams(
            dimension_semantics=("parallel",),      # megacore split on v7x
            vmem_limit_bytes=48 << 20,              # headroom-safe on 64 MiB v7x VMEM
        ),
    )(x, w1, b1, w2, b2, w3, b3, wp, bp)

    return out[:B]


def init_params(key, input_size=INPUT_SIZE, hidden_size=HIDDEN_SIZE):
    """Deterministic PyTorch-style init: U(-1/sqrt(fan_in), 1/sqrt(fan_in)).

    Weights are (in, out); the predict weight is stored already transposed as (1, H)
    so the kernel never reshapes it.
    """
    ks = jax.random.split(key, 8)

    def lin(kw, kb, fan_in, fan_out):
        bound = 1.0 / jnp.sqrt(fan_in)
        w = jax.random.uniform(kw, (fan_in, fan_out), jnp.float32, -bound, bound)
        b = jax.random.uniform(kb, (1, fan_out), jnp.float32, -bound, bound)
        return w, b

    w1, b1 = lin(ks[0], ks[1], input_size, hidden_size)
    w2, b2 = lin(ks[2], ks[3], hidden_size, hidden_size)
    w3, b3 = lin(ks[4], ks[5], hidden_size, hidden_size)
    bound_p = 1.0 / jnp.sqrt(hidden_size)
    wp = jax.random.uniform(ks[6], (1, hidden_size), jnp.float32, -bound_p, bound_p)
    bp = jax.random.uniform(ks[7], (1, 1), jnp.float32, -bound_p, bound_p)
    return {"w1": w1, "b1": b1, "w2": w2, "b2": b2,
            "w3": w3, "b3": b3, "wp": wp, "bp": bp}


def _ref(x, p):
    h = jnp.maximum(x @ p["w1"] + p["b1"], 0.0)
    h = jnp.maximum(h @ p["w2"] + p["b2"], 0.0)
    h = jnp.maximum(h @ p["w3"] + p["b3"], 0.0)
    return h @ p["wp"].T + p["bp"]


if __name__ == "__main__":
    key = jax.random.PRNGKey(0)
    kx, kx2, kp = jax.random.split(key, 3)
    params = init_params(kp)

    # Small batch (single tile, tb rounded to a multiple of 8).
    B1 = 8
    x1 = jax.random.normal(kx, (B1, INPUT_SIZE), jnp.float32)
    out1 = jax.block_until_ready(nn_forward(x1, params))
    exp1 = _ref(x1, params)
    assert out1.shape == (B1, 1), out1.shape
    assert jnp.allclose(out1, exp1, atol=2e-4, rtol=2e-4), \
        float(jnp.max(jnp.abs(out1 - exp1)))

    # Non-multiple batch with a small tile to exercise the multi-step pipelined
    # grid and the padding / slice-back path.
    B2 = 300
    x2 = jax.random.normal(kx2, (B2, INPUT_SIZE), jnp.float32)
    out2 = jax.block_until_ready(nn_forward(x2, params, block_b=128))
    exp2 = _ref(x2, params)
    assert out2.shape == (B2, 1), out2.shape
    assert jnp.allclose(out2, exp2, atol=2e-4, rtol=2e-4), \
        float(jnp.max(jnp.abs(out2 - exp2)))

    print("KERNEL_OK")
</pallas_src>

<mosaic_0001>
module attributes {stable_mosaic.version = 11 : i64} {
  func.func @mlp_kernel(%arg0: i32, %arg1: memref<8x3072xf32, #tpu.memory_space<vmem>>, %arg2: memref<3072x128xf32, #tpu.memory_space<vmem>>, %arg3: memref<1x128xf32, #tpu.memory_space<vmem>>, %arg4: memref<128x128xf32, #tpu.memory_space<vmem>>, %arg5: memref<1x128xf32, #tpu.memory_space<vmem>>, %arg6: memref<128x128xf32, #tpu.memory_space<vmem>>, %arg7: memref<1x128xf32, #tpu.memory_space<vmem>>, %arg8: memref<1x128xf32, #tpu.memory_space<vmem>>, %arg9: memref<1x1xf32, #tpu.memory_space<vmem>>, %arg10: memref<8x1xf32, #tpu.memory_space<vmem>>) attributes {dimension_semantics = [#tpu.dimension_semantics<parallel>], iteration_bounds = array<i64: 1>, scalar_prefetch = 0 : i64, scratch_operands = 0 : i64, tpu.core_type = #tpu.core_type<tc>, window_params = [{transform_indices = @transform_0, window_bounds = array<i64: 8, 3072>}, {pipeline_mode = #tpu.pipeline_mode<synchronous>, transform_indices = @transform_1, window_bounds = array<i64: 3072, 128>}, {pipeline_mode = #tpu.pipeline_mode<synchronous>, transform_indices = @transform_2, window_bounds = array<i64: 1, 128>}, {pipeline_mode = #tpu.pipeline_mode<synchronous>, transform_indices = @transform_3, window_bounds = array<i64: 128, 128>}, {pipeline_mode = #tpu.pipeline_mode<synchronous>, transform_indices = @transform_4, window_bounds = array<i64: 1, 128>}, {pipeline_mode = #tpu.pipeline_mode<synchronous>, transform_indices = @transform_5, window_bounds = array<i64: 128, 128>}, {pipeline_mode = #tpu.pipeline_mode<synchronous>, transform_indices = @transform_6, window_bounds = array<i64: 1, 128>}, {pipeline_mode = #tpu.pipeline_mode<synchronous>, transform_indices = @transform_7, window_bounds = array<i64: 1, 128>}, {pipeline_mode = #tpu.pipeline_mode<synchronous>, transform_indices = @transform_8, window_bounds = array<i64: 1, 1>}, {transform_indices = @transform_9, window_bounds = array<i64: 8, 1>}]} {
    %c0 = arith.constant 0 : index
    %c0_0 = arith.constant 0 : index
    %0 = vector.load %arg1[%c0, %c0_0] : memref<8x3072xf32, #tpu.memory_space<vmem>>, vector<8x3072xf32>
    %c0_1 = arith.constant 0 : index
    %c0_2 = arith.constant 0 : index
    %1 = vector.load %arg2[%c0_1, %c0_2] : memref<3072x128xf32, #tpu.memory_space<vmem>>, vector<3072x128xf32>
    %cst = arith.constant dense<0.000000e+00> : vector<8x128xf32>
    %2 = tpu.matmul %0, %1, %cst {dimension_numbers = #tpu.dot_dimension_numbers<[1], [0], [0], [1], [0, 0, 1, 1], [], []>} : vector<8x3072xf32>, vector<3072x128xf32>, vector<8x128xf32> -> vector<8x128xf32>
    %c0_3 = arith.constant 0 : index
    %c0_4 = arith.constant 0 : index
    %3 = vector.load %arg3[%c0_3, %c0_4] : memref<1x128xf32, #tpu.memory_space<vmem>>, vector<1x128xf32>
    %4 = vector.broadcast %3 : vector<1x128xf32> to vector<8x128xf32>
    %5 = arith.addf %2, %4 : vector<8x128xf32>
    %cst_5 = arith.constant 0.000000e+00 : f32
    %6 = vector.broadcast %cst_5 : f32 to vector<8x128xf32>
    %7 = arith.maximumf %5, %6 : vector<8x128xf32>
    %c0_6 = arith.constant 0 : index
    %c0_7 = arith.constant 0 : index
    %8 = vector.load %arg4[%c0_6, %c0_7] : memref<128x128xf32, #tpu.memory_space<vmem>>, vector<128x128xf32>
    %cst_8 = arith.constant dense<0.000000e+00> : vector<8x128xf32>
    %9 = tpu.matmul %7, %8, %cst_8 {dimension_numbers = #tpu.dot_dimension_numbers<[1], [0], [0], [1], [0, 0, 1, 1], [], []>} : vector<8x128xf32>, vector<128x128xf32>, vector<8x128xf32> -> vector<8x128xf32>
    %c0_9 = arith.constant 0 : index
    %c0_10 = arith.constant 0 : index
    %10 = vector.load %arg5[%c0_9, %c0_10] : memref<1x128xf32, #tpu.memory_space<vmem>>, vector<1x128xf32>
    %11 = vector.broadcast %10 : vector<1x128xf32> to vector<8x128xf32>
    %12 = arith.addf %9, %11 : vector<8x128xf32>
    %cst_11 = arith.constant 0.000000e+00 : f32
    %13 = vector.broadcast %cst_11 : f32 to vector<8x128xf32>
    %14 = arith.maximumf %12, %13 : vector<8x128xf32>
    %c0_12 = arith.constant 0 : index
    %c0_13 = arith.constant 0 : index
    %15 = vector.load %arg6[%c0_12, %c0_13] : memref<128x128xf32, #tpu.memory_space<vmem>>, vector<128x128xf32>
    %cst_14 = arith.constant dense<0.000000e+00> : vector<8x128xf32>
    %16 = tpu.matmul %14, %15, %cst_14 {dimension_numbers = #tpu.dot_dimension_numbers<[1], [0], [0], [1], [0, 0, 1, 1], [], []>} : vector<8x128xf32>, vector<128x128xf32>, vector<8x128xf32> -> vector<8x128xf32>
    %c0_15 = arith.constant 0 : index
    %c0_16 = arith.constant 0 : index
    %17 = vector.load %arg7[%c0_15, %c0_16] : memref<1x128xf32, #tpu.memory_space<vmem>>, vector<1x128xf32>
    %18 = vector.broadcast %17 : vector<1x128xf32> to vector<8x128xf32>
    %19 = arith.addf %16, %18 : vector<8x128xf32>
    %cst_17 = arith.constant 0.000000e+00 : f32
    %20 = vector.broadcast %cst_17 : f32 to vector<8x128xf32>
    %21 = arith.maximumf %19, %20 : vector<8x128xf32>
    %c0_18 = arith.constant 0 : index
    %c0_19 = arith.constant 0 : index
    %22 = vector.load %arg8[%c0_18, %c0_19] : memref<1x128xf32, #tpu.memory_space<vmem>>, vector<1x128xf32>
    %23 = vector.broadcast %22 : vector<1x128xf32> to vector<8x128xf32>
    %24 = arith.mulf %21, %23 : vector<8x128xf32>
    %cst_20 = arith.constant dense<0.000000e+00> : vector<8xf32>
    %25 = vector.multi_reduction <add>, %24, %cst_20 [1] : vector<8x128xf32> to vector<8xf32>
    %26 = vector.shape_cast %25 : vector<8xf32> to vector<8x1xf32>
    %c0_21 = arith.constant 0 : index
    %c0_22 = arith.constant 0 : index
    %27 = vector.load %arg9[%c0_21, %c0_22] : memref<1x1xf32, #tpu.memory_space<vmem>>, vector<1x1xf32>
    %28 = vector.broadcast %27 : vector<1x1xf32> to vector<8x1xf32>
    %29 = arith.addf %26, %28 : vector<8x1xf32>
    %c0_23 = arith.constant 0 : index
    %c0_24 = arith.constant 0 : index
    %30 = vector.load %arg10[%c0_23, %c0_24] : memref<8x1xf32, #tpu.memory_space<vmem>>, vector<8x1xf32>
    tpu.vector_store %arg10[%c0_23, %c0_24], %29 {strides = array<i32>} : memref<8x1xf32, #tpu.memory_space<vmem>>, vector<8x1xf32>,
    return
  }
  func.func @transform_0(%arg0: i32) -> (i32, i32) {
    %c0_i32 = arith.constant 0 : i32
    %c0_i32_0 = arith.constant 0 : i32
    return %arg0, %c0_i32 : i32, i32
  }
  func.func @transform_1(%arg0: i32) -> (i32, i32) {
    %c0_i32 = arith.constant 0 : i32
    %c0_i32_0 = arith.constant 0 : i32
    %c0_i32_1 = arith.constant 0 : i32
    return %c0_i32, %c0_i32_0 : i32, i32
  }
  func.func @transform_2(%arg0: i32) -> (i32, i32) {
    %c0_i32 = arith.constant 0 : i32
    %c0_i32_0 = arith.constant 0 : i32
    %c0_i32_1 = arith.constant 0 : i32
    return %c0_i32, %c0_i32_0 : i32, i32
  }
  func.func @transform_3(%arg0: i32) -> (i32, i32) {
    %c0_i32 = arith.constant 0 : i32
    %c0_i32_0 = arith.constant 0 : i32
    %c0_i32_1 = arith.constant 0 : i32
    return %c0_i32, %c0_i32_0 : i32, i32
  }
  func.func @transform_4(%arg0: i32) -> (i32, i32) {
    %c0_i32 = arith.constant 0 : i32
    %c0_i32_0 = arith.constant 0 : i32
    %c0_i32_1 = arith.constant 0 : i32
    return %c0_i32, %c0_i32_0 : i32, i32
  }
  func.func @transform_5(%arg0: i32) -> (i32, i32) {
    %c0_i32 = arith.constant 0 : i32
    %c0_i32_0 = arith.constant 0 : i32
    %c0_i32_1 = arith.constant 0 : i32
    return %c0_i32, %c0_i32_0 : i32, i32
  }
  func.func @transform_6(%arg0: i32) -> (i32, i32) {
    %c0_i32 = arith.constant 0 : i32
    %c0_i32_0 = arith.constant 0 : i32
    %c0_i32_1 = arith.constant 0 : i32
    return %c0_i32, %c0_i32_0 : i32, i32
  }
  func.func @transform_7(%arg0: i32) -> (i32, i32) {
    %c0_i32 = arith.constant 0 : i32
    %c0_i32_0 = arith.constant 0 : i32
    %c0_i32_1 = arith.constant 0 : i32
    return %c0_i32, %c0_i32_0 : i32, i32
  }
  func.func @transform_8(%arg0: i32) -> (i32, i32) {
    %c0_i32 = arith.constant 0 : i32
    %c0_i32_0 = arith.constant 0 : i32
    %c0_i32_1 = arith.constant 0 : i32
    return %c0_i32, %c0_i32_0 : i32, i32
  }
  func.func @transform_9(%arg0: i32) -> (i32, i32) {
    %c0_i32 = arith.constant 0 : i32
    %c0_i32_0 = arith.constant 0 : i32
    return %arg0, %c0_i32 : i32, i32
  }
}

</mosaic_0001>

<llo_original>
// kernel: tpu_custom_call.1
$region0: #{tpu_custom_call.1}
  #allocation0 [shape = 'u32[]', space=smem, size = 0x4, offset = 0x4, fixed_abs, tag = 'smem constant byte address 0x4 - core index']
  #allocation1 [shape = 'u32[144,128]{1,0:T(1,128)}', space=vmem, size = 0x12000, scoped, tag = 'internal scratch']
  #allocation2 [shape = 'f32[1,1]{1,0:T(1,128)S(1)}', space=vmem, size = 0x200, scoped, tag = 'scoped memory for tpu_custom_call.1']
  %s0 = inlined_call_operand.hbm [shape: f32[8,3072], index: 0, kind: input, shape index: {}]
  %s1 = inlined_call_operand.hbm [shape: f32[3072,128], index: 1, kind: input, shape index: {}]
  %s2 = inlined_call_operand.hbm [shape: f32[1,128], index: 2, kind: input, shape index: {}]
  %s3 = inlined_call_operand.hbm [shape: f32[128,128], index: 3, kind: input, shape index: {}]
  %s4 = inlined_call_operand.hbm [shape: f32[1,128], index: 4, kind: input, shape index: {}]
  %s5 = inlined_call_operand.hbm [shape: f32[128,128], index: 5, kind: input, shape index: {}]
  %s6 = inlined_call_operand.hbm [shape: f32[1,128], index: 6, kind: input, shape index: {}]
  %s7 = inlined_call_operand.hbm [shape: f32[1,128], index: 7, kind: input, shape index: {}]
  %s8 = inlined_call_operand.<no memory space> [shape: f32[1,1], index: 8, kind: input, shape index: {}]
  %s9 = inlined_call_operand.vmem [shape: f32[8,1], index: 9, kind: output, shape index: {}]
  %s10 = sld [smem:[#allocation0]]
  $region78: #{tpu_custom_call.1} parent=0
    _
  %s12 = ssub.s32 1, %s10
  %s13 = scalar_select 0, %s12, %s10
  %v14 = vstv %s8
  %15 = vst [vmem:[#allocation2] sm:$0x1] %v14
  $region1: #{tpu_custom_call.1} parent=0
    #allocation3 [shape = 'u8[98304]{0}', space=vmem, size = 0x18000, scoped, tag = 'input window, operand 0, single buffered']
    #allocation4 [shape = 's32[1]{0}', space=sflag, size = 0x4, scoped, tag = 'scoped memory for tpu_custom_call.1']
    #allocation5 [shape = 'u8[1572864]{0}', space=vmem, size = 0x180000, scoped, tag = 'input window, operand 1, single buffered']
    #allocation6 [shape = 's32[1]{0}', space=sflag, size = 0x4, scoped, tag = 'scoped memory for tpu_custom_call.1']
    #allocation7 [shape = 'u8[512]{0}', space=vmem, size = 0x400, scoped, tag = 'input window, operand 2, single buffered']
    #allocation8 [shape = 'u8[65536]{0}', space=vmem, size = 0x10000, scoped, tag = 'input window, operand 3, single buffered']
    #allocation9 [shape = 's32[1]{0}', space=sflag, size = 0x4, scoped, tag = 'scoped memory for tpu_custom_call.1']
    #allocation10 [shape = 'u8[512]{0}', space=vmem, size = 0x400, scoped, tag = 'input window, operand 4, single buffered']
    #allocation11 [shape = 'u8[65536]{0}', space=vmem, size = 0x10000, scoped, tag = 'input window, operand 5, single buffered']
    #allocation12 [shape = 's32[1]{0}', space=sflag, size = 0x4, scoped, tag = 'scoped memory for tpu_custom_call.1']
    #allocation13 [shape = 'u8[512]{0}', space=vmem, size = 0x400, scoped, tag = 'input window, operand 6, single buffered']
    #allocation14 [shape = 'u8[512]{0}', space=vmem, size = 0x400, scoped, tag = 'input window, operand 7, single buffered']
    #allocation15 [shape = 's32[1]{0}', space=sflag, size = 0x4, scoped, tag = 'scoped memory for tpu_custom_call.1']
    %16 = vsyncpa [#allocation4], 0
    %17 = vsyncpa [#allocation6], 0
    %18 = vsyncpa [#allocation9], 0
    %19 = vsyncpa [#allocation12], 0
    %20 = vsyncpa [#allocation15], 0
    // Predicated region
    $region2: #{tpu_custom_call.1} parent=1 // pred_check
      _
    $region3: #{tpu_custom_call.1} parent=1 // pred_check_branch
      %22 = sbr.rel (0) target = $region5
    $region4: #{tpu_custom_call.1} parent=1 // pred_region
      %s24 = ssub.s32 3072, 3072
      %25 = vsyncadd [#allocation4], %s24
      %s27 = sshll.u32 [#allocation3], 4
      %s28 = int_to_ptr.vmem [resolvable:$true] %s27
      %30 = dma.hbm_to_vmem [thread:$0]  %s0, 3072, %s28, [#allocation4]
    $region5: #{tpu_custom_call.1} parent=1 // pred_fallthru
      _
    // Predicated region
    $region6: #{tpu_custom_call.1} parent=1 // pred_check
      _
    $region7: #{tpu_custom_call.1} parent=1 // pred_check_branch
      %32 = sbr.rel (0) target = $region9
    $region8: #{tpu_custom_call.1} parent=1 // pred_region
      %s34 = ssub.s32 49152, 49152
      %35 = vsyncadd [#allocation6], %s34
      %s36 = sshll.u32 [#allocation5], 4
      %s37 = int_to_ptr.vmem [resolvable:$true] %s36
      %42 = dma.hbm_to_vmem [thread:$0]  %s1, 49152, %s37, [#allocation6], 128, 128, 8
    $region9: #{tpu_custom_call.1} parent=1 // pred_fallthru
      _
    // Predicated region
    $region10: #{tpu_custom_call.1} parent=1 // pred_check
      _
    $region11: #{tpu_custom_call.1} parent=1 // pred_check_branch
      %44 = sbr.rel (0) target = $region13
    $region12: #{tpu_custom_call.1} parent=1 // pred_region
      %s46 = ssub.s32 16, 16
      %47 = vsyncadd [#allocation6], %s46
      %s49 = sshll.u32 [#allocation7], 4
      %s50 = int_to_ptr.vmem [resolvable:$true] %s49
      %52 = dma.hbm_to_vmem [thread:$0]  %s2, 16, %s50, [#allocation6]
    $region13: #{tpu_custom_call.1} parent=1 // pred_fallthru
      _
    // Predicated region
    $region14: #{tpu_custom_call.1} parent=1 // pred_check
      _
    $region15: #{tpu_custom_call.1} parent=1 // pred_check_branch
      %54 = sbr.rel (0) target = $region17
    $region16: #{tpu_custom_call.1} parent=1 // pred_region
      %s56 = ssub.s32 2048, 2048
      %57 = vsyncadd [#allocation9], %s56
      %s58 = sshll.u32 [#allocation8], 4
      %s59 = int_to_ptr.vmem [resolvable:$true] %s58
      %64 = dma.hbm_to_vmem [thread:$0]  %s3, 2048, %s59, [#allocation9], 128, 128, 8
    $region17: #{tpu_custom_call.1} parent=1 // pred_fallthru
      _
    // Predicated region
    $region18: #{tpu_custom_call.1} parent=1 // pred_check
      _
    $region19: #{tpu_custom_call.1} parent=1 // pred_check_branch
      %66 = sbr.rel (0) target = $region21
    $region20: #{tpu_custom_call.1} parent=1 // pred_region
      %s68 = ssub.s32 16, 16
      %69 = vsyncadd [#allocation9], %s68
      %s71 = sshll.u32 [#allocation10], 4
      %s72 = int_to_ptr.vmem [resolvable:$true] %s71
      %74 = dma.hbm_to_vmem [thread:$0]  %s4, 16, %s72, [#allocation9]
    $region21: #{tpu_custom_call.1} parent=1 // pred_fallthru
      _
    // Predicated region
    $region22: #{tpu_custom_call.1} parent=1 // pred_check
      _
    $region23: #{tpu_custom_call.1} parent=1 // pred_check_branch
      %76 = sbr.rel (0) target = $region25
    $region24: #{tpu_custom_call.1} parent=1 // pred_region
      %s78 = ssub.s32 2048, 2048
      %79 = vsyncadd [#allocation12], %s78
      %s80 = sshll.u32 [#allocation11], 4
      %s81 = int_to_ptr.vmem [resolvable:$true] %s80
      %86 = dma.hbm_to_vmem [thread:$0]  %s5, 2048, %s81, [#allocation12], 128, 128, 8
    $region25: #{tpu_custom_call.1} parent=1 // pred_fallthru
      _
    // Predicated region
    $region26: #{tpu_custom_call.1} parent=1 // pred_check
      _
    $region27: #{tpu_custom_call.1} parent=1 // pred_check_branch
      %88 = sbr.rel (0) target = $region29
    $region28: #{tpu_custom_call.1} parent=1 // pred_region
      %s90 = ssub.s32 16, 16
      %91 = vsyncadd [#allocation12], %s90
      %s93 = sshll.u32 [#allocation13], 4
      %s94 = int_to_ptr.vmem [resolvable:$true] %s93
      %96 = dma.hbm_to_vmem [thread:$0]  %s6, 16, %s94, [#allocation12]
    $region29: #{tpu_custom_call.1} parent=1 // pred_fallthru
      _
    // Predicated region
    $region30: #{tpu_custom_call.1} parent=1 // pred_check
      _
    $region31: #{tpu_custom_call.1} parent=1 // pred_check_branch
      %98 = sbr.rel (0) target = $region33
    $region32: #{tpu_custom_call.1} parent=1 // pred_region
      %s100 = ssub.s32 16, 16
      %101 = vsyncadd [#allocation15], %s100
      %s103 = sshll.u32 [#allocation14], 4
      %s104 = int_to_ptr.vmem [resolvable:$true] %s103
      %106 = dma.hbm_to_vmem [thread:$0]  %s7, 16, %s104, [#allocation15]
    $region33: #{tpu_custom_call.1} parent=1 // pred_fallthru
      _
    // Predicated region
    $region34: #{tpu_custom_call.1} parent=1 // pred_check
      _
    $region35: #{tpu_custom_call.1} parent=1 // pred_check_branch
      %108 = sbr.rel (0) target = $region37
    $region36: #{tpu_custom_call.1} parent=1 // pred_region
      _
    $region37: #{tpu_custom_call.1} parent=1 // pred_fallthru
      _
    // Predicated region
    $region38: #{tpu_custom_call.1} parent=1 // pred_check
      _
    $region39: #{tpu_custom_call.1} parent=1 // pred_check_branch
      %110 = sbr.rel (0) target = $region41
    $region40: #{tpu_custom_call.1} parent=1 // pred_region
      %111 = dma.done [#allocation4], 3072
    $region41: #{tpu_custom_call.1} parent=1 // pred_fallthru
      _
    // Predicated region
    $region42: #{tpu_custom_call.1} parent=1 // pred_check
      _
    $region43: #{tpu_custom_call.1} parent=1 // pred_check_branch
      %113 = sbr.rel (0) target = $region45
    $region44: #{tpu_custom_call.1} parent=1 // pred_region
      %114 = dma.done [#allocation6], 49152
    $region45: #{tpu_custom_call.1} parent=1 // pred_fallthru
      _
    // Predicated region
    $region46: #{tpu_custom_call.1} parent=1 // pred_check
      _
    $region47: #{tpu_custom_call.1} parent=1 // pred_check_branch
      %116 = sbr.rel (0) target = $region49
    $region48: #{tpu_custom_call.1} parent=1 // pred_region
      %117 = dma.done [#allocation6], 16
    $region49: #{tpu_custom_call.1} parent=1 // pred_fallthru
      _
    // Predicated region
    $region50: #{tpu_custom_call.1} parent=1 // pred_check
      _
    $region51: #{tpu_custom_call.1} parent=1 // pred_check_branch
      %119 = sbr.rel (0) target = $region53
    $region52: #{tpu_custom_call.1} parent=1 // pred_region
      %120 = dma.done [#allocation9], 2048
    $region53: #{tpu_custom_call.1} parent=1 // pred_fallthru
      _
    // Predicated region
    $region54: #{tpu_custom_call.1} parent=1 // pred_check
      _
    $region55: #{tpu_custom_call.1} parent=1 // pred_check_branch
      %122 = sbr.rel (0) target = $region57
    $region56: #{tpu_custom_call.1} parent=1 // pred_region
      %123 = dma.done [#allocation9], 16
    $region57: #{tpu_custom_call.1} parent=1 // pred_fallthru
      _
    // Predicated region
    $region58: #{tpu_custom_call.1} parent=1 // pred_check
      _
    $region59: #{tpu_custom_call.1} parent=1 // pred_check_branch
      %125 = sbr.rel (0) target = $region61
    $region60: #{tpu_custom_call.1} parent=1 // pred_region
      %126 = dma.done [#allocation12], 2048
    $region61: #{tpu_custom_call.1} parent=1 // pred_fallthru
      _
    // Predicated region
    $region62: #{tpu_custom_call.1} parent=1 // pred_check
      _
    $region63: #{tpu_custom_call.1} parent=1 // pred_check_branch
      %128 = sbr.rel (0) target = $region65
    $region64: #{tpu_custom_call.1} parent=1 // pred_region
      %129 = dma.done [#allocation12], 16
    $region65: #{tpu_custom_call.1} parent=1 // pred_fallthru
      _
    // Predicated region
    $region66: #{tpu_custom_call.1} parent=1 // pred_check
      _
    $region67: #{tpu_custom_call.1} parent=1 // pred_check_branch
      %131 = sbr.rel (0) target = $region69
    $region68: #{tpu_custom_call.1} parent=1 // pred_region
      %132 = dma.done [#allocation15], 16
    $region69: #{tpu_custom_call.1} parent=1 // pred_fallthru
      _
    %v133 = vld [vmem:[#allocation3] sm:$0xff]
    %v134 = vld [vmem:[#allocation3 + $0x8] sm:$0xff]
    %v135 = vld [vmem:[#allocation3 + $0x10] sm:$0xff]
    %v136 = vld [vmem:[#allocation3 + $0x18] sm:$0xff]
    %v137 = vld [vmem:[#allocation3 + $0x20] sm:$0xff]
    %v138 = vld [vmem:[#allocation3 + $0x28] sm:$0xff]
    %v139 = vld [vmem:[#allocation3 + $0x30] sm:$0xff]
    %v140 = vld [vmem:[#allocation3 + $0x38] sm:$0xff]
    %v141 = vld [vmem:[#allocation3 + $0x40] sm:$0xff]
    %v142 = vld [vmem:[#allocation3 + $0x48] sm:$0xff]
    %v143 = vld [vmem:[#allocation3 + $0x50] sm:$0xff]
    %v144 = vld [vmem:[#allocation3 + $0x58] sm:$0xff]
    %v145 = vld [vmem:[#allocation3 + $0x60] sm:$0xff]
    %v146 = vld [vmem:[#allocation3 + $0x68] sm:$0xff]
    %v147 = vld [vmem:[#allocation3 + $0x70] sm:$0xff]
    %v148 = vld [vmem:[#allocation3 + $0x78] sm:$0xff]
    %v149 = vld [vmem:[#allocation3 + $0x80] sm:$0xff]
    %v150 = vld [vmem:[#allocation3 + $0x88] sm:$0xff]
    %v151 = vld [vmem:[#allocation3 + $0x90] sm:$0xff]
    %v152 = vld [vmem:[#allocation3 + $0x98] sm:$0xff]
    %v153 = vld [vmem:[#allocation3 + $0xa0] sm:$0xff]
    %v154 = vld [vmem:[#allocation3 + $0xa8] sm:$0xff]
    %v155 = vld [vmem:[#allocation3 + $0xb0] sm:$0xff]
    %v156 = vld [vmem:[#allocation3 + $0xb8] sm:$0xff]
    %v157 = vld [vmem:[#allocation5] sm:$0xff]
    %v158 = vld [vmem:[#allocation5 + $0x8] sm:$0xff]
    %v159 = vld [vmem:[#allocation5 + $0x10] sm:$0xff]
    %v160 = vld [vmem:[#allocation5 + $0x18] sm:$0xff]
    %v161 = vld [vmem:[#allocation5 + $0x20] sm:$0xff]
    %v162 = vld [vmem:[#allocation5 + $0x28] sm:$0xff]
    %v163 = vld [vmem:[#allocation5 + $0x30] sm:$0xff]
    %v164 = vld [vmem:[#allocation5 + $0x38] sm:$0xff]
    %v165 = vld [vmem:[#allocation5 + $0x40] sm:$0xff]
    %v166 = vld [vmem:[#allocation5 + $0x48] sm:$0xff]
    %v167 = vld [vmem:[#allocation5 + $0x50] sm:$0xff]
    %v168 = vld [vmem:[#allocation5 + $0x58] sm:$0xff]
    %v169 = vld [vmem:[#allocation5 + $0x60] sm:$0xff]
    %v170 = vld [vmem:[#allocation5 + $0x68] sm:$0xff]
    %v171 = vld [vmem:[#allocation5 + $0x70] sm:$0xff]
    %v172 = vld [vmem:[#allocation5 + $0x78] sm:$0xff]
    %v173 = vld [vmem:[#allocation5 + $0x80] sm:$0xff]
    %v174 = vld [vmem:[#allocation5 + $0x88] sm:$0xff]
    %v175 = vld [vmem:[#allocation5 + $0x90] sm:$0xff]
    %v176 = vld [vmem:[#allocation5 + $0x98] sm:$0xff]
    %v177 = vld [vmem:[#allocation5 + $0xa0] sm:$0xff]
    %v178 = vld [vmem:[#allocation5 + $0xa8] sm:$0xff]
    %v179 = vld [vmem:[#allocation5 + $0xb0] sm:$0xff]
    %v180 = vld [vmem:[#allocation5 + $0xb8] sm:$0xff]
    %v181 = vld [vmem:[#allocation5 + $0xc0] sm:$0xff]
    %v182 = vld [vmem:[#allocation5 + $0xc8] sm:$0xff]
    %v183 = vld [vmem:[#allocation5 + $0xd0] sm:$0xff]
    %v184 = vld [vmem:[#allocation5 + $0xd8] sm:$0xff]
    %v185 = vld [vmem:[#allocation5 + $0xe0] sm:$0xff]
    %v186 = vld [vmem:[#allocation5 + $0xe8] sm:$0xff]
    %v187 = vld [vmem:[#allocation5 + $0xf0] sm:$0xff]
    %v188 = vld [vmem:[#allocation5 + $0xf8] sm:$0xff]
    %v189 = vld [vmem:[#allocation5 + $0x100] sm:$0xff]
    %v190 = vld [vmem:[#allocation5 + $0x108] sm:$0xff]
    %v191 = vld [vmem:[#allocation5 + $0x110] sm:$0xff]
    %v192 = vld [vmem:[#allocation5 + $0x118] sm:$0xff]
    %v193 = vld [vmem:[#allocation5 + $0x120] sm:$0xff]
    %v194 = vld [vmem:[#allocation5 + $0x128] sm:$0xff]
    %v195 = vld [vmem:[#allocation5 + $0x130] sm:$0xff]
    %v196 = vld [vmem:[#allocation5 + $0x138] sm:$0xff]
    %v197 = vld [vmem:[#allocation5 + $0x140] sm:$0xff]
    %v198 = vld [vmem:[#allocation5 + $0x148] sm:$0xff]
    %v199 = vld [vmem:[#allocation5 + $0x150] sm:$0xff]
    %v200 = vld [vmem:[#allocation5 + $0x158] sm:$0xff]
    %v201 = vld [vmem:[#allocation5 + $0x160] sm:$0xff]
    %v202 = vld [vmem:[#allocation5 + $0x168] sm:$0xff]
    %v203 = vld [vmem:[#allocation5 + $0x170] sm:$0xff]
    %v204 = vld [vmem:[#allocation5 + $0x178] sm:$0xff]
    %v205 = vld [vmem:[#allocation5 + $0x180] sm:$0xff]
    %v206 = vld [vmem:[#allocation5 + $0x188] sm:$0xff]
    %v207 = vld [vmem:[#allocation5 + $0x190] sm:$0xff]
    %v208 = vld [vmem:[#allocation5 + $0x198] sm:$0xff]
    %v209 = vld [vmem:[#allocation5 + $0x1a0] sm:$0xff]
    %v210 = vld [vmem:[#allocation5 + $0x1a8] sm:$0xff]
    %v211 = vld [vmem:[#allocation5 + $0x1b0] sm:$0xff]
    %v212 = vld [vmem:[#allocation5 + $0x1b8] sm:$0xff]
    %v213 = vld [vmem:[#allocation5 + $0x1c0] sm:$0xff]
    %v214 = vld [vmem:[#allocation5 + $0x1c8] sm:$0xff]
    %v215 = vld [vmem:[#allocation5 + $0x1d0] sm:$0xff]
    %v216 = vld [vmem:[#allocation5 + $0x1d8] sm:$0xff]
    %v217 = vld [vmem:[#allocation5 + $0x1e0] sm:$0xff]
    %v218 = vld [vmem:[#allocation5 + $0x1e8] sm:$0xff]
    %v219 = vld [vmem:[#allocation5 + $0x1f0] sm:$0xff]
    %v220 = vld [vmem:[#allocation5 + $0x1f8] sm:$0xff]
    %v221 = vld [vmem:[#allocation5 + $0x200] sm:$0xff]
    %v222 = vld [vmem:[#allocation5 + $0x208] sm:$0xff]
    %v223 = vld [vmem:[#allocation5 + $0x210] sm:$0xff]
    %v224 = vld [vmem:[#allocation5 + $0x218] sm:$0xff]
    %v225 = vld [vmem:[#allocation5 + $0x220] sm:$0xff]
    %v226 = vld [vmem:[#allocation5 + $0x228] sm:$0xff]
    %v227 = vld [vmem:[#allocation5 + $0x230] sm:$0xff]
    %v228 = vld [vmem:[#allocation5 + $0x238] sm:$0xff]
    %v229 = vld [vmem:[#allocation5 + $0x240] sm:$0xff]
    %v230 = vld [vmem:[#allocation5 + $0x248] sm:$0xff]
    %v231 = vld [vmem:[#allocation5 + $0x250] sm:$0xff]
    %v232 = vld [vmem:[#allocation5 + $0x258] sm:$0xff]
    %v233 = vld [vmem:[#allocation5 + $0x260] sm:$0xff]
    %v234 = vld [vmem:[#allocation5 + $0x268] sm:$0xff]
    %v235 = vld [vmem:[#allocation5 + $0x270] sm:$0xff]
    %v236 = vld [vmem:[#allocation5 + $0x278] sm:$0xff]
    %v237 = vld [vmem:[#allocation5 + $0x280] sm:$0xff]
    %v238 = vld [vmem:[#allocation5 + $0x288] sm:$0xff]
    %v239 = vld [vmem:[#allocation5 + $0x290] sm:$0xff]
    %v240 = vld [vmem:[#allocation5 + $0x298] sm:$0xff]
    %v241 = vld [vmem:[#allocation5 + $0x2a0] sm:$0xff]
    %v242 = vld [vmem:[#allocation5 + $0x2a8] sm:$0xff]
    %v243 = vld [vmem:[#allocation5 + $0x2b0] sm:$0xff]
    %v244 = vld [vmem:[#allocation5 + $0x2b8] sm:$0xff]
    %v245 = vld [vmem:[#allocation5 + $0x2c0] sm:$0xff]
    %v246 = vld [vmem:[#allocation5 + $0x2c8] sm:$0xff]
    %v247 = vld [vmem:[#allocation5 + $0x2d0] sm:$0xff]
    %v248 = vld [vmem:[#allocation5 + $0x2d8] sm:$0xff]
    %v249 = vld [vmem:[#allocation5 + $0x2e0] sm:$0xff]
    %v250 = vld [vmem:[#allocation5 + $0x2e8] sm:$0xff]
    %v251 = vld [vmem:[#allocation5 + $0x2f0] sm:$0xff]
    %v252 = vld [vmem:[#allocation5 + $0x2f8] sm:$0xff]
    %v253 = vld [vmem:[#allocation5 + $0x300] sm:$0xff]
    %v254 = vld [vmem:[#allocation5 + $0x308] sm:$0xff]
    %v255 = vld [vmem:[#allocation5 + $0x310] sm:$0xff]
    %v256 = vld [vmem:[#allocation5 + $0x318] sm:$0xff]
    %v257 = vld [vmem:[#allocation5 + $0x320] sm:$0xff]
    %v258 = vld [vmem:[#allocation5 + $0x328] sm:$0xff]
    %v259 = vld [vmem:[#allocation5 + $0x330] sm:$0xff]
    %v260 = vld [vmem:[#allocation5 + $0x338] sm:$0xff]
    %v261 = vld [vmem:[#allocation5 + $0x340] sm:$0xff]
    %v262 = vld [vmem:[#allocation5 + $0x348] sm:$0xff]
    %v263 = vld [vmem:[#allocation5 + $0x350] sm:$0xff]
    %v264 = vld [vmem:[#allocation5 + $0x358] sm:$0xff]
    %v265 = vld [vmem:[#allocation5 + $0x360] sm:$0xff]
    %v266 = vld [vmem:[#allocation5 + $0x368] sm:$0xff]
    %v267 = vld [vmem:[#allocation5 + $0x370] sm:$0xff]
    %v268 = vld [vmem:[#allocation5 + $0x378] sm:$0xff]
    %v269 = vld [vmem:[#allocation5 + $0x380] sm:$0xff]
    %v270 = vld [vmem:[#allocation5 + $0x388] sm:$0xff]
    %v271 = vld [vmem:[#allocation5 + $0x390] sm:$0xff]
    %v272 = vld [vmem:[#allocation5 + $0x398] sm:$0xff]
    %v273 = vld [vmem:[#allocation5 + $0x3a0] sm:$0xff]
    %v274 = vld [vmem:[#allocation5 + $0x3a8] sm:$0xff]
    %v275 = vld [vmem:[#allocation5 + $0x3b0] sm:$0xff]
    %v276 = vld [vmem:[#allocation5 + $0x3b8] sm:$0xff]
    %v277 = vld [vmem:[#allocation5 + $0x3c0] sm:$0xff]
    %v278 = vld [vmem:[#allocation5 + $0x3c8] sm:$0xff]
    %v279 = vld [vmem:[#allocation5 + $0x3d0] sm:$0xff]
    %v280 = vld [vmem:[#allocation5 + $0x3d8] sm:$0xff]
    %v281 = vld [vmem:[#allocation5 + $0x3e0] sm:$0xff]
    %v282 = vld [vmem:[#allocation5 + $0x3e8] sm:$0xff]
    %v283 = vld [vmem:[#allocation5 + $0x3f0] sm:$0xff]
    %v284 = vld [vmem:[#allocation5 + $0x3f8] sm:$0xff]
    %v285 = vld [vmem:[#allocation5 + $0x400] sm:$0xff]
    %v286 = vld [vmem:[#allocation5 + $0x408] sm:$0xff]
    %v287 = vld [vmem:[#allocation5 + $0x410] sm:$0xff]
    %v288 = vld [vmem:[#allocation5 + $0x418] sm:$0xff]
    %v289 = vld [vmem:[#allocation5 + $0x420] sm:$0xff]
    %v290 = vld [vmem:[#allocation5 + $0x428] sm:$0xff]
    %v291 = vld [vmem:[#allocation5 + $0x430] sm:$0xff]
    %v292 = vld [vmem:[#allocation5 + $0x438] sm:$0xff]
    %v293 = vld [vmem:[#allocation5 + $0x440] sm:$0xff]
    %v294 = vld [vmem:[#allocation5 + $0x448] sm:$0xff]
    %v295 = vld [vmem:[#allocation5 + $0x450] sm:$0xff]
    %v296 = vld [vmem:[#allocation5 + $0x458] sm:$0xff]
    %v297 = vld [vmem:[#allocation5 + $0x460] sm:$0xff]
    %v298 = vld [vmem:[#allocation5 + $0x468] sm:$0xff]
    %v299 = vld [vmem:[#allocation5 + $0x470] sm:$0xff]
    %v300 = vld [vmem:[#allocation5 + $0x478] sm:$0xff]
    %v301 = vld [vmem:[#allocation5 + $0x480] sm:$0xff]
    %v302 = vld [vmem:[#allocation5 + $0x488] sm:$0xff]
    %v303 = vld [vmem:[#allocation5 + $0x490] sm:$0xff]
    %v304 = vld [vmem:[#allocation5 + $0x498] sm:$0xff]
    %v305 = vld [vmem:[#allocation5 + $0x4a0] sm:$0xff]
    %v306 = vld [vmem:[#allocation5 + $0x4a8] sm:$0xff]
    %v307 = vld [vmem:[#allocation5 + $0x4b0] sm:$0xff]
    %v308 = vld [vmem:[#allocation5 + $0x4b8] sm:$0xff]
    %v309 = vld [vmem:[#allocation5 + $0x4c0] sm:$0xff]
    %v310 = vld [vmem:[#allocation5 + $0x4c8] sm:$0xff]
    %v311 = vld [vmem:[#allocation5 + $0x4d0] sm:$0xff]
    %v312 = vld [vmem:[#allocation5 + $0x4d8] sm:$0xff]
    %v313 = vld [vmem:[#allocation5 + $0x4e0] sm:$0xff]
    %v314 = vld [vmem:[#allocation5 + $0x4e8] sm:$0xff]
    %v315 = vld [vmem:[#allocation5 + $0x4f0] sm:$0xff]
    %v316 = vld [vmem:[#allocation5 + $0x4f8] sm:$0xff]
    %v317 = vld [vmem:[#allocation5 + $0x500] sm:$0xff]
    %v318 = vld [vmem:[#allocation5 + $0x508] sm:$0xff]
    %v319 = vld [vmem:[#allocation5 + $0x510] sm:$0xff]
    %v320 = vld [vmem:[#allocation5 + $0x518] sm:$0xff]
    %v321 = vld [vmem:[#allocation5 + $0x520] sm:$0xff]
    %v322 = vld [vmem:[#allocation5 + $0x528] sm:$0xff]
    %v323 = vld [vmem:[#allocation5 + $0x530] sm:$0xff]
    %v324 = vld [vmem:[#allocation5 + $0x538] sm:$0xff]
    %v325 = vld [vmem:[#allocation5 + $0x540] sm:$0xff]
    %v326 = vld [vmem:[#allocation5 + $0x548] sm:$0xff]
    %v327 = vld [vmem:[#allocation5 + $0x550] sm:$0xff]
    %v328 = vld [vmem:[#allocation5 + $0x558] sm:$0xff]
    %v329 = vld [vmem:[#allocation5 + $0x560] sm:$0xff]
    %v330 = vld [vmem:[#allocation5 + $0x568] sm:$0xff]
    %v331 = vld [vmem:[#allocation5 + $0x570] sm:$0xff]
    %v332 = vld [vmem:[#allocation5 + $0x578] sm:$0xff]
    %v333 = vld [vmem:[#allocation5 + $0x580] sm:$0xff]
    %v334 = vld [vmem:[#allocation5 + $0x588] sm:$0xff]
    %v335 = vld [vmem:[#allocation5 + $0x590] sm:$0xff]
    %v336 = vld [vmem:[#allocation5 + $0x598] sm:$0xff]
    %v337 = vld [vmem:[#allocation5 + $0x5a0] sm:$0xff]
    %v338 = vld [vmem:[#allocation5 + $0x5a8] sm:$0xff]
    %v339 = vld [vmem:[#allocation5 + $0x5b0] sm:$0xff]
    %v340 = vld [vmem:[#allocation5 + $0x5b8] sm:$0xff]
    %v341 = vld [vmem:[#allocation5 + $0x5c0] sm:$0xff]
    %v342 = vld [vmem:[#allocation5 + $0x5c8] sm:$0xff]
    %v343 = vld [vmem:[#allocation5 + $0x5d0] sm:$0xff]
    %v344 = vld [vmem:[#allocation5 + $0x5d8] sm:$0xff]
    %v345 = vld [vmem:[#allocation5 + $0x5e0] sm:$0xff]
    %v346 = vld [vmem:[#allocation5 + $0x5e8] sm:$0xff]
    %v347 = vld [vmem:[#allocation5 + $0x5f0] sm:$0xff]
    %v348 = vld [vmem:[#allocation5 + $0x5f8] sm:$0xff]
    %v349 = vld [vmem:[#allocation5 + $0x600] sm:$0xff]
    %v350 = vld [vmem:[#allocation5 + $0x608] sm:$0xff]
    %v351 = vld [vmem:[#allocation5 + $0x610] sm:$0xff]
    %v352 = vld [vmem:[#allocation5 + $0x618] sm:$0xff]
    %v353 = vld [vmem:[#allocation5 + $0x620] sm:$0xff]
    %v354 = vld [vmem:[#allocation5 + $0x628] sm:$0xff]
    %v355 = vld [vmem:[#allocation5 + $0x630] sm:$0xff]
    %v356 = vld [vmem:[#allocation5 + $0x638] sm:$0xff]
    %v357 = vld [vmem:[#allocation5 + $0x640] sm:$0xff]
    %v358 = vld [vmem:[#allocation5 + $0x648] sm:$0xff]
    %v359 = vld [vmem:[#allocation5 + $0x650] sm:$0xff]
    %v360 = vld [vmem:[#allocation5 + $0x658] sm:$0xff]
    %v361 = vld [vmem:[#allocation5 + $0x660] sm:$0xff]
    %v362 = vld [vmem:[#allocation5 + $0x668] sm:$0xff]
    %v363 = vld [vmem:[#allocation5 + $0x670] sm:$0xff]
    %v364 = vld [vmem:[#allocation5 + $0x678] sm:$0xff]
    %v365 = vld [vmem:[#allocation5 + $0x680] sm:$0xff]
    %v366 = vld [vmem:[#allocation5 + $0x688] sm:$0xff]
    %v367 = vld [vmem:[#allocation5 + $0x690] sm:$0xff]
    %v368 = vld [vmem:[#allocation5 + $0x698] sm:$0xff]
    %v369 = vld [vmem:[#allocation5 + $0x6a0] sm:$0xff]
    %v370 = vld [vmem:[#allocation5 + $0x6a8] sm:$0xff]
    %v371 = vld [vmem:[#allocation5 + $0x6b0] sm:$0xff]
    %v372 = vld [vmem:[#allocation5 + $0x6b8] sm:$0xff]
    %v373 = vld [vmem:[#allocation5 + $0x6c0] sm:$0xff]
    %v374 = vld [vmem:[#allocation5 + $0x6c8] sm:$0xff]
    %v375 = vld [vmem:[#allocation5 + $0x6d0] sm:$0xff]
    %v376 = vld [vmem:[#allocation5 + $0x6d8] sm:$0xff]
    %v377 = vld [vmem:[#allocation5 + $0x6e0] sm:$0xff]
    %v378 = vld [vmem:[#allocation5 + $0x6e8] sm:$0xff]
    %v379 = vld [vmem:[#allocation5 + $0x6f0] sm:$0xff]
    %v380 = vld [vmem:[#allocation5 + $0x6f8] sm:$0xff]
    %v381 = vld [vmem:[#allocation5 + $0x700] sm:$0xff]
    %v382 = vld [vmem:[#allocation5 + $0x708] sm:$0xff]
    %v383 = vld [vmem:[#allocation5 + $0x710] sm:$0xff]
    %v384 = vld [vmem:[#allocation5 + $0x718] sm:$0xff]
    %v385 = vld [vmem:[#allocation5 + $0x720] sm:$0xff]
    %v386 = vld [vmem:[#allocation5 + $0x728] sm:$0xff]
    %v387 = vld [vmem:[#allocation5 + $0x730] sm:$0xff]
    %v388 = vld [vmem:[#allocation5 + $0x738] sm:$0xff]
    %v389 = vld [vmem:[#allocation5 + $0x740] sm:$0xff]
    %v390 = vld [vmem:[#allocation5 + $0x748] sm:$0xff]
    %v391 = vld [vmem:[#allocation5 + $0x750] sm:$0xff]
    %v392 = vld [vmem:[#allocation5 + $0x758] sm:$0xff]
    %v393 = vld [vmem:[#allocation5 + $0x760] sm:$0xff]
    %v394 = vld [vmem:[#allocation5 + $0x768] sm:$0xff]
    %v395 = vld [vmem:[#allocation5 + $0x770] sm:$0xff]
    %v396 = vld [vmem:[#allocation5 + $0x778] sm:$0xff]
    %v397 = vld [vmem:[#allocation5 + $0x780] sm:$0xff]
    %v398 = vld [vmem:[#allocation5 + $0x788] sm:$0xff]
    %v399 = vld [vmem:[#allocation5 + $0x790] sm:$0xff]
    %v400 = vld [vmem:[#allocation5 + $0x798] sm:$0xff]
    %v401 = vld [vmem:[#allocation5 + $0x7a0] sm:$0xff]
    %v402 = vld [vmem:[#allocation5 + $0x7a8] sm:$0xff]
    %v403 = vld [vmem:[#allocation5 + $0x7b0] sm:$0xff]
    %v404 = vld [vmem:[#allocation5 + $0x7b8] sm:$0xff]
    %v405 = vld [vmem:[#allocation5 + $0x7c0] sm:$0xff]
    %v406 = vld [vmem:[#allocation5 + $0x7c8] sm:$0xff]
    %v407 = vld [vmem:[#allocation5 + $0x7d0] sm:$0xff]
    %v408 = vld [vmem:[#allocation5 + $0x7d8] sm:$0xff]
    %v409 = vld [vmem:[#allocation5 + $0x7e0] sm:$0xff]
    %v410 = vld [vmem:[#allocation5 + $0x7e8] sm:$0xff]
    %v411 = vld [vmem:[#allocation5 + $0x7f0] sm:$0xff]
    %v412 = vld [vmem:[#allocation5 + $0x7f8] sm:$0xff]
    %v413 = vld [vmem:[#allocation5 + $0x800] sm:$0xff]
    %v414 = vld [vmem:[#allocation5 + $0x808] sm:$0xff]
    %v415 = vld [vmem:[#allocation5 + $0x810] sm:$0xff]
    %v416 = vld [vmem:[#allocation5 + $0x818] sm:$0xff]
    %v417 = vld [vmem:[#allocation5 + $0x820] sm:$0xff]
    %v418 = vld [vmem:[#allocation5 + $0x828] sm:$0xff]
    %v419 = vld [vmem:[#allocation5 + $0x830] sm:$0xff]
    %v420 = vld [vmem:[#allocation5 + $0x838] sm:$0xff]
    %v421 = vld [vmem:[#allocation5 + $0x840] sm:$0xff]
    %v422 = vld [vmem:[#allocation5 + $0x848] sm:$0xff]
    %v423 = vld [vmem:[#allocation5 + $0x850] sm:$0xff]
    %v424 = vld [vmem:[#allocation5 + $0x858] sm:$0xff]
    %v425 = vld [vmem:[#allocation5 + $0x860] sm:$0xff]
    %v426 = vld [vmem:[#allocation5 + $0x868] sm:$0xff]
    %v427 = vld [vmem:[#allocation5 + $0x870] sm:$0xff]
    %v428 = vld [vmem:[#allocation5 + $0x878] sm:$0xff]
    %v429 = vld [vmem:[#allocation5 + $0x880] sm:$0xff]
    %v430 = vld [vmem:[#allocation5 + $0x888] sm:$0xff]
    %v431 = vld [vmem:[#allocation5 + $0x890] sm:$0xff]
    %v432 = vld [vmem:[#allocation5 + $0x898] sm:$0xff]
    %v433 = vld [vmem:[#allocation5 + $0x8a0] sm:$0xff]
    %v434 = vld [vmem:[#allocation5 + $0x8a8] sm:$0xff]
    %v435 = vld [vmem:[#allocation5 + $0x8b0] sm:$0xff]
    %v436 = vld [vmem:[#allocation5 + $0x8b8] sm:$0xff]
    %v437 = vld [vmem:[#allocation5 + $0x8c0] sm:$0xff]
    %v438 = vld [vmem:[#allocation5 + $0x8c8] sm:$0xff]
    %v439 = vld [vmem:[#allocation5 + $0x8d0] sm:$0xff]
    %v440 = vld [vmem:[#allocation5 + $0x8d8] sm:$0xff]
    %v441 = vld [vmem:[#allocation5 + $0x8e0] sm:$0xff]
    %v442 = vld [vmem:[#allocation5 + $0x8e8] sm:$0xff]
    %v443 = vld [vmem:[#allocation5 + $0x8f0] sm:$0xff]
    %v444 = vld [vmem:[#allocation5 + $0x8f8] sm:$0xff]
    %v445 = vld [vmem:[#allocation5 + $0x900] sm:$0xff]
    %v446 = vld [vmem:[#allocation5 + $0x908] sm:$0xff]
    %v447 = vld [vmem:[#allocation5 + $0x910] sm:$0xff]
    %v448 = vld [vmem:[#allocation5 + $0x918] sm:$0xff]
    %v449 = vld [vmem:[#allocation5 + $0x920] sm:$0xff]
    %v450 = vld [vmem:[#allocation5 + $0x928] sm:$0xff]
    %v451 = vld [vmem:[#allocation5 + $0x930] sm:$0xff]
    %v452 = vld [vmem:[#allocation5 + $0x938] sm:$0xff]
    %v453 = vld [vmem:[#allocation5 + $0x940] sm:$0xff]
    %v454 = vld [vmem:[#allocation5 + $0x948] sm:$0xff]
    %v455 = vld [vmem:[#allocation5 + $0x950] sm:$0xff]
    %v456 = vld [vmem:[#allocation5 + $0x958] sm:$0xff]
    %v457 = vld [vmem:[#allocation5 + $0x960] sm:$0xff]
    %v458 = vld [vmem:[#allocation5 + $0x968] sm:$0xff]
    %v459 = vld [vmem:[#allocation5 + $0x970] sm:$0xff]
    %v460 = vld [vmem:[#allocation5 + $0x978] sm:$0xff]
    %v461 = vld [vmem:[#allocation5 + $0x980] sm:$0xff]
    %v462 = vld [vmem:[#allocation5 + $0x988] sm:$0xff]
    %v463 = vld [vmem:[#allocation5 + $0x990] sm:$0xff]
    %v464 = vld [vmem:[#allocation5 + $0x998] sm:$0xff]
    %v465 = vld [vmem:[#allocation5 + $0x9a0] sm:$0xff]
    %v466 = vld [vmem:[#allocation5 + $0x9a8] sm:$0xff]
    %v467 = vld [vmem:[#allocation5 + $0x9b0] sm:$0xff]
    %v468 = vld [vmem:[#allocation5 + $0x9b8] sm:$0xff]
    %v469 = vld [vmem:[#allocation5 + $0x9c0] sm:$0xff]
    %v470 = vld [vmem:[#allocation5 + $0x9c8] sm:$0xff]
    %v471 = vld [vmem:[#allocation5 + $0x9d0] sm:$0xff]
    %v472 = vld [vmem:[#allocation5 + $0x9d8] sm:$0xff]
    %v473 = vld [vmem:[#allocation5 + $0x9e0] sm:$0xff]
    %v474 = vld [vmem:[#allocation5 + $0x9e8] sm:$0xff]
    %v475 = vld [vmem:[#allocation5 + $0x9f0] sm:$0xff]
    %v476 = vld [vmem:[#allocation5 + $0x9f8] sm:$0xff]
    %v477 = vld [vmem:[#allocation5 + $0xa00] sm:$0xff]
    %v478 = vld [vmem:[#allocation5 + $0xa08] sm:$0xff]
    %v479 = vld [vmem:[#allocation5 + $0xa10] sm:$0xff]
    %v480 = vld [vmem:[#allocation5 + $0xa18] sm:$0xff]
    %v481 = vld [vmem:[#allocation5 + $0xa20] sm:$0xff]
    %v482 = vld [vmem:[#allocation5 + $0xa28] sm:$0xff]
    %v483 = vld [vmem:[#allocation5 + $0xa30] sm:$0xff]
    %v484 = vld [vmem:[#allocation5 + $0xa38] sm:$0xff]
    %v485 = vld [vmem:[#allocation5 + $0xa40] sm:$0xff]
    %v486 = vld [vmem:[#allocation5 + $0xa48] sm:$0xff]
    %v487 = vld [vmem:[#allocation5 + $0xa50] sm:$0xff]
    %v488 = vld [vmem:[#allocation5 + $0xa58] sm:$0xff]
    %v489 = vld [vmem:[#allocation5 + $0xa60] sm:$0xff]
    %v490 = vld [vmem:[#allocation5 + $0xa68] sm:$0xff]
    %v491 = vld [vmem:[#allocation5 + $0xa70] sm:$0xff]
    %v492 = vld [vmem:[#allocation5 + $0xa78] sm:$0xff]
    %v493 = vld [vmem:[#allocation5 + $0xa80] sm:$0xff]
    %v494 = vld [vmem:[#allocation5 + $0xa88] sm:$0xff]
    %v495 = vld [vmem:[#allocation5 + $0xa90] sm:$0xff]
    %v496 = vld [vmem:[#allocation5 + $0xa98] sm:$0xff]
    %v497 = vld [vmem:[#allocation5 + $0xaa0] sm:$0xff]
    %v498 = vld [vmem:[#allocation5 + $0xaa8] sm:$0xff]
    %v499 = vld [vmem:[#allocation5 + $0xab0] sm:$0xff]
    %v500 = vld [vmem:[#allocation5 + $0xab8] sm:$0xff]
    %v501 = vld [vmem:[#allocation5 + $0xac0] sm:$0xff]
    %v502 = vld [vmem:[#allocation5 + $0xac8] sm:$0xff]
    %v503 = vld [vmem:[#allocation5 + $0xad0] sm:$0xff]
    %v504 = vld [vmem:[#allocation5 + $0xad8] sm:$0xff]
    %v505 = vld [vmem:[#allocation5 + $0xae0] sm:$0xff]
    %v506 = vld [vmem:[#allocation5 + $0xae8] sm:$0xff]
    %v507 = vld [vmem:[#allocation5 + $0xaf0] sm:$0xff]
    %v508 = vld [vmem:[#allocation5 + $0xaf8] sm:$0xff]
    %v509 = vld [vmem:[#allocation5 + $0xb00] sm:$0xff]
    %v510 = vld [vmem:[#allocation5 + $0xb08] sm:$0xff]
    %v511 = vld [vmem:[#allocation5 + $0xb10] sm:$0xff]
    %v512 = vld [vmem:[#allocation5 + $0xb18] sm:$0xff]
    %v513 = vld [vmem:[#allocation5 + $0xb20] sm:$0xff]
    %v514 = vld [vmem:[#allocation5 + $0xb28] sm:$0xff]
    %v515 = vld [vmem:[#allocation5 + $0xb30] sm:$0xff]
    %v516 = vld [vmem:[#allocation5 + $0xb38] sm:$0xff]
    %v517 = vld [vmem:[#allocation5 + $0xb40] sm:$0xff]
    %v518 = vld [vmem:[#allocation5 + $0xb48] sm:$0xff]
    %v519 = vld [vmem:[#allocation5 + $0xb50] sm:$0xff]
    %v520 = vld [vmem:[#allocation5 + $0xb58] sm:$0xff]
    %v521 = vld [vmem:[#allocation5 + $0xb60] sm:$0xff]
    %v522 = vld [vmem:[#allocation5 + $0xb68] sm:$0xff]
    %v523 = vld [vmem:[#allocation5 + $0xb70] sm:$0xff]
    %v524 = vld [vmem:[#allocation5 + $0xb78] sm:$0xff]
    %v525 = vld [vmem:[#allocation5 + $0xb80] sm:$0xff]
    %v526 = vld [vmem:[#allocation5 + $0xb88] sm:$0xff]
    %v527 = vld [vmem:[#allocation5 + $0xb90] sm:$0xff]
    %v528 = vld [vmem:[#allocation5 + $0xb98] sm:$0xff]
    %v529 = vld [vmem:[#allocation5 + $0xba0] sm:$0xff]
    %v530 = vld [vmem:[#allocation5 + $0xba8] sm:$0xff]
    %v531 = vld [vmem:[#allocation5 + $0xbb0] sm:$0xff]
    %v532 = vld [vmem:[#allocation5 + $0xbb8] sm:$0xff]
    %v533 = vld [vmem:[#allocation5 + $0xbc0] sm:$0xff]
    %v534 = vld [vmem:[#allocation5 + $0xbc8] sm:$0xff]
    %v535 = vld [vmem:[#allocation5 + $0xbd0] sm:$0xff]
    %v536 = vld [vmem:[#allocation5 + $0xbd8] sm:$0xff]
    %v537 = vld [vmem:[#allocation5 + $0xbe0] sm:$0xff]
    %v538 = vld [vmem:[#allocation5 + $0xbe8] sm:$0xff]
    %v539 = vld [vmem:[#allocation5 + $0xbf0] sm:$0xff]
    %v540 = vld [vmem:[#allocation5 + $0xbf8] sm:$0xff]
    %v541 = vld [vmem:[#allocation7] sm:$0x1]
    %v543 = vlaneseq
    %v544 = vshrl.u32 %v543, 7
    %v545 = vsub.s32 0, %v544
    %v546 = vrot.slane %v541, %v545
    %548 = vmatprep.subr.mxu0 0.0
    %549 = vmatpush1.msra.mxu0 %v157
    %550 = vmatprep.subr.mxu0 0.0
    %551 = vmatpush1.msra.mxu0 %v158
    %552 = vmatprep.subr.mxu0 0.0
    %553 = vmatpush1.msra.mxu0 %v159
    %554 = vmatprep.subr.mxu0 0.0
    %555 = vmatpush1.msra.mxu0 %v160
    %556 = vmatprep.subr.mxu0 0.0
    %557 = vmatpush1.msra.mxu0 %v161
    %558 = vmatprep.subr.mxu0 0.0
    %559 = vmatpush1.msra.mxu0 %v162
    %560 = vmatprep.subr.mxu0 0.0
    %561 = vmatpush1.msra.mxu0 %v163
    %562 = vmatprep.subr.mxu0 0.0
    %563 = vmatpush1.msra.mxu0 %v164
    %564 = vmatprep.subr.mxu0 0.0
    %565 = vmatpush1.msra.mxu0 %v165
    %566 = vmatprep.subr.mxu0 0.0
    %567 = vmatpush1.msra.mxu0 %v166
    %568 = vmatprep.subr.mxu0 0.0
    %569 = vmatpush1.msra.mxu0 %v167
    %570 = vmatprep.subr.mxu0 0.0
    %571 = vmatpush1.msra.mxu0 %v168
    %572 = vmatprep.subr.mxu0 0.0
    %573 = vmatpush1.msra.mxu0 %v169
    %574 = vmatprep.subr.mxu0 0.0
    %575 = vmatpush1.msra.mxu0 %v170
    %576 = vmatprep.subr.mxu0 0.0
    %577 = vmatpush1.msra.mxu0 %v171
    %578 = vmatprep.subr.mxu0 0.0
    %579 = vmatpush1.msra.mxu0 %v172
    %580 = vmatprep.subr.mxu0 0.0
    %581 = vmatpush1.msra.mxu0 %v173
    %582 = vmatprep.subr.mxu0 0.0
    %583 = vmatpush1.msra.mxu0 %v174
    %584 = vmatprep.subr.mxu0 0.0
    %585 = vmatpush1.msra.mxu0 %v175
    %586 = vmatprep.subr.mxu0 0.0
    %587 = vmatpush1.msra.mxu0 %v176
    %588 = vmatprep.subr.mxu0 0.0
    %589 = vmatpush1.msra.mxu0 %v177
    %590 = vmatprep.subr.mxu0 0.0
    %591 = vmatpush1.msra.mxu0 %v178
    %592 = vmatprep.subr.mxu0 0.0
    %593 = vmatpush1.msra.mxu0 %v179
    %594 = vmatprep.subr.mxu0 0.0
    %595 = vmatpush1.msra.mxu0 %v180
    %596 = vmatprep.subr.mxu0 0.0
    %597 = vmatpush1.msra.mxu0 %v181
    %598 = vmatprep.subr.mxu0 0.0
    %599 = vmatpush1.msra.mxu0 %v182
    %600 = vmatprep.subr.mxu0 0.0
    %601 = vmatpush1.msra.mxu0 %v183
    %602 = vmatprep.subr.mxu0 0.0
    %603 = vmatpush1.msra.mxu0 %v184
    %604 = vmatprep.subr.mxu0 0.0
    %605 = vmatpush1.msra.mxu0 %v185
    %606 = vmatprep.subr.mxu0 0.0
    %607 = vmatpush1.msra.mxu0 %v186
    %608 = vmatprep.subr.mxu0 0.0
    %609 = vmatpush1.msra.mxu0 %v187
    %610 = vmatprep.subr.mxu0 0.0
    %611 = vmatpush1.msra.mxu0 %v188
    %612 = vmatprep.mubr.f32.mxu0 %v134
    %613 = vmatmul.mubr.f32.gmra.mrb[0].mxu0 %v133
    %v614 = vpop.f32.mrb[0].mxu0
    %v615 = vadd.f32 %v546, %v614
    %v616 = vpop.f32.mrb[0].mxu0
    %617 = vdwg.mxu0
    %618 = vmatprep.subr.mxu0 0.0
    %619 = vmatpush1.msra.mxu0 %v189
    %620 = vmatprep.subr.mxu0 0.0
    %621 = vmatpush1.msra.mxu0 %v190
    %622 = vmatprep.subr.mxu0 0.0
    %623 = vmatpush1.msra.mxu0 %v191
    %624 = vmatprep.subr.mxu0 0.0
    %625 = vmatpush1.msra.mxu0 %v192
    %626 = vmatprep.subr.mxu0 0.0
    %627 = vmatpush1.msra.mxu0 %v193
    %628 = vmatprep.subr.mxu0 0.0
    %629 = vmatpush1.msra.mxu0 %v194
    %630 = vmatprep.subr.mxu0 0.0
    %631 = vmatpush1.msra.mxu0 %v195
    %632 = vmatprep.subr.mxu0 0.0
    %633 = vmatpush1.msra.mxu0 %v196
    %634 = vmatprep.subr.mxu0 0.0
    %635 = vmatpush1.msra.mxu0 %v197
    %636 = vmatprep.subr.mxu0 0.0
    %637 = vmatpush1.msra.mxu0 %v198
    %638 = vmatprep.subr.mxu0 0.0
    %639 = vmatpush1.msra.mxu0 %v199
    %640 = vmatprep.subr.mxu0 0.0
    %641 = vmatpush1.msra.mxu0 %v200
    %642 = vmatprep.subr.mxu0 0.0
    %643 = vmatpush1.msra.mxu0 %v201
    %644 = vmatprep.subr.mxu0 0.0
    %645 = vmatpush1.msra.mxu0 %v202
    %646 = vmatprep.subr.mxu0 0.0
    %647 = vmatpush1.msra.mxu0 %v203
    %648 = vmatprep.subr.mxu0 0.0
    %649 = vmatpush1.msra.mxu0 %v204
    %650 = vmatprep.subr.mxu0 0.0
    %651 = vmatpush1.msra.mxu0 %v205
    %652 = vmatprep.subr.mxu0 0.0
    %653 = vmatpush1.msra.mxu0 %v206
    %654 = vmatprep.subr.mxu0 0.0
    %655 = vmatpush1.msra.mxu0 %v207
    %656 = vmatprep.subr.mxu0 0.0
    %657 = vmatpush1.msra.mxu0 %v208
    %658 = vmatprep.subr.mxu0 0.0
    %659 = vmatpush1.msra.mxu0 %v209
    %660 = vmatprep.subr.mxu0 0.0
    %661 = vmatpush1.msra.mxu0 %v210
    %662 = vmatprep.subr.mxu0 0.0
    %663 = vmatpush1.msra.mxu0 %v211
    %664 = vmatprep.subr.mxu0 0.0
    %665 = vmatpush1.msra.mxu0 %v212
    %666 = vmatprep.subr.mxu0 0.0
    %667 = vmatpush1.msra.mxu0 %v213
    %668 = vmatprep.subr.mxu0 0.0
    %669 = vmatpush1.msra.mxu0 %v214
    %670 = vmatprep.subr.mxu0 0.0
    %671 = vmatpush1.msra.mxu0 %v215
    %672 = vmatprep.subr.mxu0 0.0
    %673 = vmatpush1.msra.mxu0 %v216
    %674 = vmatprep.subr.mxu0 0.0
    %675 = vmatpush1.msra.mxu0 %v217
    %676 = vmatprep.subr.mxu0 0.0
    %677 = vmatpush1.msra.mxu0 %v218
    %678 = vmatprep.subr.mxu0 0.0
    %679 = vmatpush1.msra.mxu0 %v219
    %680 = vmatprep.subr.mxu0 0.0
    %681 = vmatpush1.msra.mxu0 %v220
    %682 = vmatprep.mubr.f32.mxu0 %v136
    %683 = vmatmul.mubr.f32.gmra.mrb[0].mxu0 %v135
    %v684 = vpop.f32.mrb[0].mxu0
    %v685 = vadd.f32 %v615, %v684
    %v686 = vpop.f32.mrb[0].mxu0
    %687 = vdwg.mxu0
    %688 = vmatprep.subr.mxu0 0.0
    %689 = vmatpush1.msra.mxu0 %v221
    %690 = vmatprep.subr.mxu0 0.0
    %691 = vmatpush1.msra.mxu0 %v222
    %692 = vmatprep.subr.mxu0 0.0
    %693 = vmatpush1.msra.mxu0 %v223
    %694 = vmatprep.subr.mxu0 0.0
    %695 = vmatpush1.msra.mxu0 %v224
    %696 = vmatprep.subr.mxu0 0.0
    %697 = vmatpush1.msra.mxu0 %v225
    %698 = vmatprep.subr.mxu0 0.0
    %699 = vmatpush1.msra.mxu0 %v226
    %700 = vmatprep.subr.mxu0 0.0
    %701 = vmatpush1.msra.mxu0 %v227
    %702 = vmatprep.subr.mxu0 0.0
    %703 = vmatpush1.msra.mxu0 %v228
    %704 = vmatprep.subr.mxu0 0.0
    %705 = vmatpush1.msra.mxu0 %v229
    %706 = vmatprep.subr.mxu0 0.0
    %707 = vmatpush1.msra.mxu0 %v230
    %708 = vmatprep.subr.mxu0 0.0
    %709 = vmatpush1.msra.mxu0 %v231
    %710 = vmatprep.subr.mxu0 0.0
    %711 = vmatpush1.msra.mxu0 %v232
    %712 = vmatprep.subr.mxu0 0.0
    %713 = vmatpush1.msra.mxu0 %v233
    %714 = vmatprep.subr.mxu0 0.0
    %715 = vmatpush1.msra.mxu0 %v234
    %716 = vmatprep.subr.mxu0 0.0
    %717 = vmatpush1.msra.mxu0 %v235
    %718 = vmatprep.subr.mxu0 0.0
    %719 = vmatpush1.msra.mxu0 %v236
    %720 = vmatprep.subr.mxu0 0.0
    %721 = vmatpush1.msra.mxu0 %v237
    %722 = vmatprep.subr.mxu0 0.0
    %723 = vmatpush1.msra.mxu0 %v238
    %724 = vmatprep.subr.mxu0 0.0
    %725 = vmatpush1.msra.mxu0 %v239
    %726 = vmatprep.subr.mxu0 0.0
    %727 = vmatpush1.msra.mxu0 %v240
    %728 = vmatprep.subr.mxu0 0.0
    %729 = vmatpush1.msra.mxu0 %v241
    %730 = vmatprep.subr.mxu0 0.0
    %731 = vmatpush1.msra.mxu0 %v242
    %732 = vmatprep.subr.mxu0 0.0
    %733 = vmatpush1.msra.mxu0 %v243
    %734 = vmatprep.subr.mxu0 0.0
    %735 = vmatpush1.msra.mxu0 %v244
    %736 = vmatprep.subr.mxu0 0.0
    %737 = vmatpush1.msra.mxu0 %v245
    %738 = vmatprep.subr.mxu0 0.0
    %739 = vmatpush1.msra.mxu0 %v246
    %740 = vmatprep.subr.mxu0 0.0
    %741 = vmatpush1.msra.mxu0 %v247
    %742 = vmatprep.subr.mxu0 0.0
    %743 = vmatpush1.msra.mxu0 %v248
    %744 = vmatprep.subr.mxu0 0.0
    %745 = vmatpush1.msra.mxu0 %v249
    %746 = vmatprep.subr.mxu0 0.0
    %747 = vmatpush1.msra.mxu0 %v250
    %748 = vmatprep.subr.mxu0 0.0
    %749 = vmatpush1.msra.mxu0 %v251
    %750 = vmatprep.subr.mxu0 0.0
    %751 = vmatpush1.msra.mxu0 %v252
    %752 = vmatprep.mubr.f32.mxu0 %v138
    %753 = vmatmul.mubr.f32.gmra.mrb[0].mxu0 %v137
    %v754 = vpop.f32.mrb[0].mxu0
    %v755 = vadd.f32 %v685, %v754
    %v756 = vpop.f32.mrb[0].mxu0
    %757 = vdwg.mxu0
    %758 = vmatprep.subr.mxu0 0.0
    %759 = vmatpush1.msra.mxu0 %v253
    %760 = vmatprep.subr.mxu0 0.0
    %761 = vmatpush1.msra.mxu0 %v254
    %762 = vmatprep.subr.mxu0 0.0
    %763 = vmatpush1.msra.mxu0 %v255
    %764 = vmatprep.subr.mxu0 0.0
    %765 = vmatpush1.msra.mxu0 %v256
    %766 = vmatprep.subr.mxu0 0.0
    %767 = vmatpush1.msra.mxu0 %v257
    %768 = vmatprep.subr.mxu0 0.0
    %769 = vmatpush1.msra.mxu0 %v258
    %770 = vmatprep.subr.mxu0 0.0
    %771 = vmatpush1.msra.mxu0 %v259
    %772 = vmatprep.subr.mxu0 0.0
    %773 = vmatpush1.msra.mxu0 %v260
    %774 = vmatprep.subr.mxu0 0.0
    %775 = vmatpush1.msra.mxu0 %v261
    %776 = vmatprep.subr.mxu0 0.0
    %777 = vmatpush1.msra.mxu0 %v262
    %778 = vmatprep.subr.mxu0 0.0
    %779 = vmatpush1.msra.mxu0 %v263
    %780 = vmatprep.subr.mxu0 0.0
    %781 = vmatpush1.msra.mxu0 %v264
    %782 = vmatprep.subr.mxu0 0.0
    %783 = vmatpush1.msra.mxu0 %v265
    %784 = vmatprep.subr.mxu0 0.0
    %785 = vmatpush1.msra.mxu0 %v266
    %786 = vmatprep.subr.mxu0 0.0
    %787 = vmatpush1.msra.mxu0 %v267
    %788 = vmatprep.subr.mxu0 0.0
    %789 = vmatpush1.msra.mxu0 %v268
    %790 = vmatprep.subr.mxu0 0.0
    %791 = vmatpush1.msra.mxu0 %v269
    %792 = vmatprep.subr.mxu0 0.0
    %793 = vmatpush1.msra.mxu0 %v270
    %794 = vmatprep.subr.mxu0 0.0
    %795 = vmatpush1.msra.mxu0 %v271
    %796 = vmatprep.subr.mxu0 0.0
    %797 = vmatpush1.msra.mxu0 %v272
    %798 = vmatprep.subr.mxu0 0.0
    %799 = vmatpush1.msra.mxu0 %v273
    %800 = vmatprep.subr.mxu0 0.0
    %801 = vmatpush1.msra.mxu0 %v274
    %802 = vmatprep.subr.mxu0 0.0
    %803 = vmatpush1.msra.mxu0 %v275
    %804 = vmatprep.subr.mxu0 0.0
    %805 = vmatpush1.msra.mxu0 %v276
    %806 = vmatprep.subr.mxu0 0.0
    %807 = vmatpush1.msra.mxu0 %v277
    %808 = vmatprep.subr.mxu0 0.0
    %809 = vmatpush1.msra.mxu0 %v278
    %810 = vmatprep.subr.mxu0 0.0
    %811 = vmatpush1.msra.mxu0 %v279
    %812 = vmatprep.subr.mxu0 0.0
    %813 = vmatpush1.msra.mxu0 %v280
    %814 = vmatprep.subr.mxu0 0.0
    %815 = vmatpush1.msra.mxu0 %v281
    %816 = vmatprep.subr.mxu0 0.0
    %817 = vmatpush1.msra.mxu0 %v282
    %818 = vmatprep.subr.mxu0 0.0
    %819 = vmatpush1.msra.mxu0 %v283
    %820 = vmatprep.subr.mxu0 0.0
    %821 = vmatpush1.msra.mxu0 %v284
    %822 = vmatprep.mubr.f32.mxu0 %v140
    %823 = vmatmul.mubr.f32.gmra.mrb[0].mxu0 %v139
    %v824 = vpop.f32.mrb[0].mxu0
    %v825 = vadd.f32 %v755, %v824
    %v826 = vpop.f32.mrb[0].mxu0
    %827 = vdwg.mxu0
    %828 = vmatprep.subr.mxu0 0.0
    %829 = vmatpush1.msra.mxu0 %v285
    %830 = vmatprep.subr.mxu0 0.0
    %831 = vmatpush1.msra.mxu0 %v286
    %832 = vmatprep.subr.mxu0 0.0
    %833 = vmatpush1.msra.mxu0 %v287
    %834 = vmatprep.subr.mxu0 0.0
    %835 = vmatpush1.msra.mxu0 %v288
    %836 = vmatprep.subr.mxu0 0.0
    %837 = vmatpush1.msra.mxu0 %v289
    %838 = vmatprep.subr.mxu0 0.0
    %839 = vmatpush1.msra.mxu0 %v290
    %840 = vmatprep.subr.mxu0 0.0
    %841 = vmatpush1.msra.mxu0 %v291
    %842 = vmatprep.subr.mxu0 0.0
    %843 = vmatpush1.msra.mxu0 %v292
    %844 = vmatprep.subr.mxu0 0.0
    %845 = vmatpush1.msra.mxu0 %v293
    %846 = vmatprep.subr.mxu0 0.0
    %847 = vmatpush1.msra.mxu0 %v294
    %848 = vmatprep.subr.mxu0 0.0
    %849 = vmatpush1.msra.mxu0 %v295
    %850 = vmatprep.subr.mxu0 0.0
    %851 = vmatpush1.msra.mxu0 %v296
    %852 = vmatprep.subr.mxu0 0.0
    %853 = vmatpush1.msra.mxu0 %v297
    %854 = vmatprep.subr.mxu0 0.0
    %855 = vmatpush1.msra.mxu0 %v298
    %856 = vmatprep.subr.mxu0 0.0
    %857 = vmatpush1.msra.mxu0 %v299
    %858 = vmatprep.subr.mxu0 0.0
    %859 = vmatpush1.msra.mxu0 %v300
    %860 = vmatprep.subr.mxu0 0.0
    %861 = vmatpush1.msra.mxu0 %v301
    %862 = vmatprep.subr.mxu0 0.0
    %863 = vmatpush1.msra.mxu0 %v302
    %864 = vmatprep.subr.mxu0 0.0
    %865 = vmatpush1.msra.mxu0 %v303
    %866 = vmatprep.subr.mxu0 0.0
    %867 = vmatpush1.msra.mxu0 %v304
    %868 = vmatprep.subr.mxu0 0.0
    %869 = vmatpush1.msra.mxu0 %v305
    %870 = vmatprep.subr.mxu0 0.0
    %871 = vmatpush1.msra.mxu0 %v306
    %872 = vmatprep.subr.mxu0 0.0
    %873 = vmatpush1.msra.mxu0 %v307
    %874 = vmatprep.subr.mxu0 0.0
    %875 = vmatpush1.msra.mxu0 %v308
    %876 = vmatprep.subr.mxu0 0.0
    %877 = vmatpush1.msra.mxu0 %v309
    %878 = vmatprep.subr.mxu0 0.0
    %879 = vmatpush1.msra.mxu0 %v310
    %880 = vmatprep.subr.mxu0 0.0
    %881 = vmatpush1.msra.mxu0 %v311
    %882 = vmatprep.subr.mxu0 0.0
    %883 = vmatpush1.msra.mxu0 %v312
    %884 = vmatprep.subr.mxu0 0.0
    %885 = vmatpush1.msra.mxu0 %v313
    %886 = vmatprep.subr.mxu0 0.0
    %887 = vmatpush1.msra.mxu0 %v314
    %888 = vmatprep.subr.mxu0 0.0
    %889 = vmatpush1.msra.mxu0 %v315
    %890 = vmatprep.subr.mxu0 0.0
    %891 = vmatpush1.msra.mxu0 %v316
    %892 = vmatprep.mubr.f32.mxu0 %v142
    %893 = vmatmul.mubr.f32.gmra.mrb[0].mxu0 %v141
    %v894 = vpop.f32.mrb[0].mxu0
    %v895 = vadd.f32 %v825, %v894
    %v896 = vpop.f32.mrb[0].mxu0
    %897 = vdwg.mxu0
    %898 = vmatprep.subr.mxu0 0.0
    %899 = vmatpush1.msra.mxu0 %v317
    %900 = vmatprep.subr.mxu0 0.0
    %901 = vmatpush1.msra.mxu0 %v318
    %902 = vmatprep.subr.mxu0 0.0
    %903 = vmatpush1.msra.mxu0 %v319
    %904 = vmatprep.subr.mxu0 0.0
    %905 = vmatpush1.msra.mxu0 %v320
    %906 = vmatprep.subr.mxu0 0.0
    %907 = vmatpush1.msra.mxu0 %v321
    %908 = vmatprep.subr.mxu0 0.0
    %909 = vmatpush1.msra.mxu0 %v322
    %910 = vmatprep.subr.mxu0 0.0
    %911 = vmatpush1.msra.mxu0 %v323
    %912 = vmatprep.subr.mxu0 0.0
    %913 = vmatpush1.msra.mxu0 %v324
    %914 = vmatprep.subr.mxu0 0.0
    %915 = vmatpush1.msra.mxu0 %v325
    %916 = vmatprep.subr.mxu0 0.0
    %917 = vmatpush1.msra.mxu0 %v326
    %918 = vmatprep.subr.mxu0 0.0
    %919 = vmatpush1.msra.mxu0 %v327
    %920 = vmatprep.subr.mxu0 0.0
    %921 = vmatpush1.msra.mxu0 %v328
    %922 = vmatprep.subr.mxu0 0.0
    %923 = vmatpush1.msra.mxu0 %v329
    %924 = vmatprep.subr.mxu0 0.0
    %925 = vmatpush1.msra.mxu0 %v330
    %926 = vmatprep.subr.mxu0 0.0
    %927 = vmatpush1.msra.mxu0 %v331
    %928 = vmatprep.subr.mxu0 0.0
    %929 = vmatpush1.msra.mxu0 %v332
    %930 = vmatprep.subr.mxu0 0.0
    %931 = vmatpush1.msra.mxu0 %v333
    %932 = vmatprep.subr.mxu0 0.0
    %933 = vmatpush1.msra.mxu0 %v334
    %934 = vmatprep.subr.mxu0 0.0
    %935 = vmatpush1.msra.mxu0 %v335
    %936 = vmatprep.subr.mxu0 0.0
    %937 = vmatpush1.msra.mxu0 %v336
    %938 = vmatprep.subr.mxu0 0.0
    %939 = vmatpush1.msra.mxu0 %v337
    %940 = vmatprep.subr.mxu0 0.0
    %941 = vmatpush1.msra.mxu0 %v338
    %942 = vmatprep.subr.mxu0 0.0
    %943 = vmatpush1.msra.mxu0 %v339
    %944 = vmatprep.subr.mxu0 0.0
    %945 = vmatpush1.msra.mxu0 %v340
    %946 = vmatprep.subr.mxu0 0.0
    %947 = vmatpush1.msra.mxu0 %v341
    %948 = vmatprep.subr.mxu0 0.0
    %949 = vmatpush1.msra.mxu0 %v342
    %950 = vmatprep.subr.mxu0 0.0
    %951 = vmatpush1.msra.mxu0 %v343
    %952 = vmatprep.subr.mxu0 0.0
    %953 = vmatpush1.msra.mxu0 %v344
    %954 = vmatprep.subr.mxu0 0.0
    %955 = vmatpush1.msra.mxu0 %v345
    %956 = vmatprep.subr.mxu0 0.0
    %957 = vmatpush1.msra.mxu0 %v346
    %958 = vmatprep.subr.mxu0 0.0
    %959 = vmatpush1.msra.mxu0 %v347
    %960 = vmatprep.subr.mxu0 0.0
    %961 = vmatpush1.msra.mxu0 %v348
    %962 = vmatprep.mubr.f32.mxu0 %v144
    %963 = vmatmul.mubr.f32.gmra.mrb[0].mxu0 %v143
    %v964 = vpop.f32.mrb[0].mxu0
    %v965 = vadd.f32 %v895, %v964
    %v966 = vpop.f32.mrb[0].mxu0
    %967 = vdwg.mxu0
    %968 = vmatprep.subr.mxu0 0.0
    %969 = vmatpush1.msra.mxu0 %v349
    %970 = vmatprep.subr.mxu0 0.0
    %971 = vmatpush1.msra.mxu0 %v350
    %972 = vmatprep.subr.mxu0 0.0
    %973 = vmatpush1.msra.mxu0 %v351
    %974 = vmatprep.subr.mxu0 0.0
    %975 = vmatpush1.msra.mxu0 %v352
    %976 = vmatprep.subr.mxu0 0.0
    %977 = vmatpush1.msra.mxu0 %v353
    %978 = vmatprep.subr.mxu0 0.0
    %979 = vmatpush1.msra.mxu0 %v354
    %980 = vmatprep.subr.mxu0 0.0
    %981 = vmatpush1.msra.mxu0 %v355
    %982 = vmatprep.subr.mxu0 0.0
    %983 = vmatpush1.msra.mxu0 %v356
    %984 = vmatprep.subr.mxu0 0.0
    %985 = vmatpush1.msra.mxu0 %v357
    %986 = vmatprep.subr.mxu0 0.0
    %987 = vmatpush1.msra.mxu0 %v358
    %988 = vmatprep.subr.mxu0 0.0
    %989 = vmatpush1.msra.mxu0 %v359
    %990 = vmatprep.subr.mxu0 0.0
    %991 = vmatpush1.msra.mxu0 %v360
    %992 = vmatprep.subr.mxu0 0.0
    %993 = vmatpush1.msra.mxu0 %v361
    %994 = vmatprep.subr.mxu0 0.0
    %995 = vmatpush1.msra.mxu0 %v362
    %996 = vmatprep.subr.mxu0 0.0
    %997 = vmatpush1.msra.mxu0 %v363
    %998 = vmatprep.subr.mxu0 0.0
    %999 = vmatpush1.msra.mxu0 %v364
    %1000 = vmatprep.subr.mxu0 0.0
    %1001 = vmatpush1.msra.mxu0 %v365
    %1002 = vmatprep.subr.mxu0 0.0
    %1003 = vmatpush1.msra.mxu0 %v366
    %1004 = vmatprep.subr.mxu0 0.0
    %1005 = vmatpush1.msra.mxu0 %v367
    %1006 = vmatprep.subr.mxu0 0.0
    %1007 = vmatpush1.msra.mxu0 %v368
    %1008 = vmatprep.subr.mxu0 0.0
    %1009 = vmatpush1.msra.mxu0 %v369
    %1010 = vmatprep.subr.mxu0 0.0
    %1011 = vmatpush1.msra.mxu0 %v370
    %1012 = vmatprep.subr.mxu0 0.0
    %1013 = vmatpush1.msra.mxu0 %v371
    %1014 = vmatprep.subr.mxu0 0.0
    %1015 = vmatpush1.msra.mxu0 %v372
    %1016 = vmatprep.subr.mxu0 0.0
    %1017 = vmatpush1.msra.mxu0 %v373
    %1018 = vmatprep.subr.mxu0 0.0
    %1019 = vmatpush1.msra.mxu0 %v374
    %1020 = vmatprep.subr.mxu0 0.0
    %1021 = vmatpush1.msra.mxu0 %v375
    %1022 = vmatprep.subr.mxu0 0.0
    %1023 = vmatpush1.msra.mxu0 %v376
    %1024 = vmatprep.subr.mxu0 0.0
    %1025 = vmatpush1.msra.mxu0 %v377
    %1026 = vmatprep.subr.mxu0 0.0
    %1027 = vmatpush1.msra.mxu0 %v378
    %1028 = vmatprep.subr.mxu0 0.0
    %1029 = vmatpush1.msra.mxu0 %v379
    %1030 = vmatprep.subr.mxu0 0.0
    %1031 = vmatpush1.msra.mxu0 %v380
    %1032 = vmatprep.mubr.f32.mxu0 %v146
    %1033 = vmatmul.mubr.f32.gmra.mrb[0].mxu0 %v145
    %v1034 = vpop.f32.mrb[0].mxu0
    %v1035 = vadd.f32 %v965, %v1034
    %v1036 = vpop.f32.mrb[0].mxu0
    %1037 = vdwg.mxu0
    %1038 = vmatprep.subr.mxu0 0.0
    %1039 = vmatpush1.msra.mxu0 %v381
    %1040 = vmatprep.subr.mxu0 0.0
    %1041 = vmatpush1.msra.mxu0 %v382
    %1042 = vmatprep.subr.mxu0 0.0
    %1043 = vmatpush1.msra.mxu0 %v383
    %1044 = vmatprep.subr.mxu0 0.0
    %1045 = vmatpush1.msra.mxu0 %v384
    %1046 = vmatprep.subr.mxu0 0.0
    %1047 = vmatpush1.msra.mxu0 %v385
    %1048 = vmatprep.subr.mxu0 0.0
    %1049 = vmatpush1.msra.mxu0 %v386
    %1050 = vmatprep.subr.mxu0 0.0
    %1051 = vmatpush1.msra.mxu0 %v387
    %1052 = vmatprep.subr.mxu0 0.0
    %1053 = vmatpush1.msra.mxu0 %v388
    %1054 = vmatprep.subr.mxu0 0.0
    %1055 = vmatpush1.msra.mxu0 %v389
    %1056 = vmatprep.subr.mxu0 0.0
    %1057 = vmatpush1.msra.mxu0 %v390
    %1058 = vmatprep.subr.mxu0 0.0
    %1059 = vmatpush1.msra.mxu0 %v391
    %1060 = vmatprep.subr.mxu0 0.0
    %1061 = vmatpush1.msra.mxu0 %v392
    %1062 = vmatprep.subr.mxu0 0.0
    %1063 = vmatpush1.msra.mxu0 %v393
    %1064 = vmatprep.subr.mxu0 0.0
    %1065 = vmatpush1.msra.mxu0 %v394
    %1066 = vmatprep.subr.mxu0 0.0
    %1067 = vmatpush1.msra.mxu0 %v395
    %1068 = vmatprep.subr.mxu0 0.0
    %1069 = vmatpush1.msra.mxu0 %v396
    %1070 = vmatprep.subr.mxu0 0.0
    %1071 = vmatpush1.msra.mxu0 %v397
    %1072 = vmatprep.subr.mxu0 0.0
    %1073 = vmatpush1.msra.mxu0 %v398
    %1074 = vmatprep.subr.mxu0 0.0
    %1075 = vmatpush1.msra.mxu0 %v399
    %1076 = vmatprep.subr.mxu0 0.0
    %1077 = vmatpush1.msra.mxu0 %v400
    %1078 = vmatprep.subr.mxu0 0.0
    %1079 = vmatpush1.msra.mxu0 %v401
    %1080 = vmatprep.subr.mxu0 0.0
    %1081 = vmatpush1.msra.mxu0 %v402
    %1082 = vmatprep.subr.mxu0 0.0
    %1083 = vmatpush1.msra.mxu0 %v403
    %1084 = vmatprep.subr.mxu0 0.0
    %1085 = vmatpush1.msra.mxu0 %v404
    %1086 = vmatprep.subr.mxu0 0.0
    %1087 = vmatpush1.msra.mxu0 %v405
    %1088 = vmatprep.subr.mxu0 0.0
    %1089 = vmatpush1.msra.mxu0 %v406
    %1090 = vmatprep.subr.mxu0 0.0
    %1091 = vmatpush1.msra.mxu0 %v407
    %1092 = vmatprep.subr.mxu0 0.0
    %1093 = vmatpush1.msra.mxu0 %v408
    %1094 = vmatprep.subr.mxu0 0.0
    %1095 = vmatpush1.msra.mxu0 %v409
    %1096 = vmatprep.subr.mxu0 0.0
    %1097 = vmatpush1.msra.mxu0 %v410
    %1098 = vmatprep.subr.mxu0 0.0
    %1099 = vmatpush1.msra.mxu0 %v411
    %1100 = vmatprep.subr.mxu0 0.0
    %1101 = vmatpush1.msra.mxu0 %v412
    %1102 = vmatprep.mubr.f32.mxu0 %v148
    %1103 = vmatmul.mubr.f32.gmra.mrb[0].mxu0 %v147
    %v1104 = vpop.f32.mrb[0].mxu0
    %v1105 = vadd.f32 %v1035, %v1104
    %v1106 = vpop.f32.mrb[0].mxu0
    %1107 = vdwg.mxu0
    %1108 = vmatprep.subr.mxu0 0.0
    %1109 = vmatpush1.msra.mxu0 %v413
    %1110 = vmatprep.subr.mxu0 0.0
    %1111 = vmatpush1.msra.mxu0 %v414
    %1112 = vmatprep.subr.mxu0 0.0
    %1113 = vmatpush1.msra.mxu0 %v415
    %1114 = vmatprep.subr.mxu0 0.0
    %1115 = vmatpush1.msra.mxu0 %v416
    %1116 = vmatprep.subr.mxu0 0.0
    %1117 = vmatpush1.msra.mxu0 %v417
    %1118 = vmatprep.subr.mxu0 0.0
    %1119 = vmatpush1.msra.mxu0 %v418
    %1120 = vmatprep.subr.mxu0 0.0
    %1121 = vmatpush1.msra.mxu0 %v419
    %1122 = vmatprep.subr.mxu0 0.0
    %1123 = vmatpush1.msra.mxu0 %v420
    %1124 = vmatprep.subr.mxu0 0.0
    %1125 = vmatpush1.msra.mxu0 %v421
    %1126 = vmatprep.subr.mxu0 0.0
    %1127 = vmatpush1.msra.mxu0 %v422
    %1128 = vmatprep.subr.mxu0 0.0
    %1129 = vmatpush1.msra.mxu0 %v423
    %1130 = vmatprep.subr.mxu0 0.0
    %1131 = vmatpush1.msra.mxu0 %v424
    %1132 = vmatprep.subr.mxu0 0.0
    %1133 = vmatpush1.msra.mxu0 %v425
    %1134 = vmatprep.subr.mxu0 0.0
    %1135 = vmatpush1.msra.mxu0 %v426
    %1136 = vmatprep.subr.mxu0 0.0
    %1137 = vmatpush1.msra.mxu0 %v427
    %1138 = vmatprep.subr.mxu0 0.0
    %1139 = vmatpush1.msra.mxu0 %v428
    %1140 = vmatprep.subr.mxu0 0.0
    %1141 = vmatpush1.msra.mxu0 %v429
    %1142 = vmatprep.subr.mxu0 0.0
    %1143 = vmatpush1.msra.mxu0 %v430
    %1144 = vmatprep.subr.mxu0 0.0
    %1145 = vmatpush1.msra.mxu0 %v431
    %1146 = vmatprep.subr.mxu0 0.0
    %1147 = vmatpush1.msra.mxu0 %v432
    %1148 = vmatprep.subr.mxu0 0.0
    %1149 = vmatpush1.msra.mxu0 %v433
    %1150 = vmatprep.subr.mxu0 0.0
    %1151 = vmatpush1.msra.mxu0 %v434
    %1152 = vmatprep.subr.mxu0 0.0
    %1153 = vmatpush1.msra.mxu0 %v435
    %1154 = vmatprep.subr.mxu0 0.0
    %1155 = vmatpush1.msra.mxu0 %v436
    %1156 = vmatprep.subr.mxu0 0.0
    %1157 = vmatpush1.msra.mxu0 %v437
    %1158 = vmatprep.subr.mxu0 0.0
    %1159 = vmatpush1.msra.mxu0 %v438
    %1160 = vmatprep.subr.mxu0 0.0
    %1161 = vmatpush1.msra.mxu0 %v439
    %1162 = vmatprep.subr.mxu0 0.0
    %1163 = vmatpush1.msra.mxu0 %v440
    %1164 = vmatprep.subr.mxu0 0.0
    %1165 = vmatpush1.msra.mxu0 %v441
    %1166 = vmatprep.subr.mxu0 0.0
    %1167 = vmatpush1.msra.mxu0 %v442
    %1168 = vmatprep.subr.mxu0 0.0
    %1169 = vmatpush1.msra.mxu0 %v443
    %1170 = vmatprep.subr.mxu0 0.0
    %1171 = vmatpush1.msra.mxu0 %v444
    %1172 = vmatprep.mubr.f32.mxu0 %v150
    %1173 = vmatmul.mubr.f32.gmra.mrb[0].mxu0 %v149
    %v1174 = vpop.f32.mrb[0].mxu0
    %v1175 = vadd.f32 %v1105, %v1174
    %v1176 = vpop.f32.mrb[0].mxu0
    %1177 = vdwg.mxu0
    %1178 = vmatprep.subr.mxu0 0.0
    %1179 = vmatpush1.msra.mxu0 %v445
    %1180 = vmatprep.subr.mxu0 0.0
    %1181 = vmatpush1.msra.mxu0 %v446
    %1182 = vmatprep.subr.mxu0 0.0
    %1183 = vmatpush1.msra.mxu0 %v447
    %1184 = vmatprep.subr.mxu0 0.0
    %1185 = vmatpush1.msra.mxu0 %v448
    %1186 = vmatprep.subr.mxu0 0.0
    %1187 = vmatpush1.msra.mxu0 %v449
    %1188 = vmatprep.subr.mxu0 0.0
    %1189 = vmatpush1.msra.mxu0 %v450
    %1190 = vmatprep.subr.mxu0 0.0
    %1191 = vmatpush1.msra.mxu0 %v451
    %1192 = vmatprep.subr.mxu0 0.0
    %1193 = vmatpush1.msra.mxu0 %v452
    %1194 = vmatprep.subr.mxu0 0.0
    %1195 = vmatpush1.msra.mxu0 %v453
    %1196 = vmatprep.subr.mxu0 0.0
    %1197 = vmatpush1.msra.mxu0 %v454
    %1198 = vmatprep.subr.mxu0 0.0
    %1199 = vmatpush1.msra.mxu0 %v455
    %1200 = vmatprep.subr.mxu0 0.0
    %1201 = vmatpush1.msra.mxu0 %v456
    %1202 = vmatprep.subr.mxu0 0.0
    %1203 = vmatpush1.msra.mxu0 %v457
    %1204 = vmatprep.subr.mxu0 0.0
    %1205 = vmatpush1.msra.mxu0 %v458
    %1206 = vmatprep.subr.mxu0 0.0
    %1207 = vmatpush1.msra.mxu0 %v459
    %1208 = vmatprep.subr.mxu0 0.0
    %1209 = vmatpush1.msra.mxu0 %v460
    %1210 = vmatprep.subr.mxu0 0.0
    %1211 = vmatpush1.msra.mxu0 %v461
    %1212 = vmatprep.subr.mxu0 0.0
    %1213 = vmatpush1.msra.mxu0 %v462
    %1214 = vmatprep.subr.mxu0 0.0
    %1215 = vmatpush1.msra.mxu0 %v463
    %1216 = vmatprep.subr.mxu0 0.0
    %1217 = vmatpush1.msra.mxu0 %v464
    %1218 = vmatprep.subr.mxu0 0.0
    %1219 = vmatpush1.msra.mxu0 %v465
    %1220 = vmatprep.subr.mxu0 0.0
    %1221 = vmatpush1.msra.mxu0 %v466
    %1222 = vmatprep.subr.mxu0 0.0
    %1223 = vmatpush1.msra.mxu0 %v467
    %1224 = vmatprep.subr.mxu0 0.0
    %1225 = vmatpush1.msra.mxu0 %v468
    %1226 = vmatprep.subr.mxu0 0.0
    %1227 = vmatpush1.msra.mxu0 %v469
    %1228 = vmatprep.subr.mxu0 0.0
    %1229 = vmatpush1.msra.mxu0 %v470
    %1230 = vmatprep.subr.mxu0 0.0
    %1231 = vmatpush1.msra.mxu0 %v471
    %1232 = vmatprep.subr.mxu0 0.0
    %1233 = vmatpush1.msra.mxu0 %v472
    %1234 = vmatprep.subr.mxu0 0.0
    %1235 = vmatpush1.msra.mxu0 %v473
    %1236 = vmatprep.subr.mxu0 0.0
    %1237 = vmatpush1.msra.mxu0 %v474
    %1238 = vmatprep.subr.mxu0 0.0
    %1239 = vmatpush1.msra.mxu0 %v475
    %1240 = vmatprep.subr.mxu0 0.0
    %1241 = vmatpush1.msra.mxu0 %v476
    %1242 = vmatprep.mubr.f32.mxu0 %v152
    %1243 = vmatmul.mubr.f32.gmra.mrb[0].mxu0 %v151
    %v1244 = vpop.f32.mrb[0].mxu0
    %v1245 = vadd.f32 %v1175, %v1244
    %v1246 = vpop.f32.mrb[0].mxu0
    %1247 = vdwg.mxu0
    %1248 = vmatprep.subr.mxu0 0.0
    %1249 = vmatpush1.msra.mxu0 %v477
    %1250 = vmatprep.subr.mxu0 0.0
    %1251 = vmatpush1.msra.mxu0 %v478
    %1252 = vmatprep.subr.mxu0 0.0
    %1253 = vmatpush1.msra.mxu0 %v479
    %1254 = vmatprep.subr.mxu0 0.0
    %1255 = vmatpush1.msra.mxu0 %v480
    %1256 = vmatprep.subr.mxu0 0.0
    %1257 = vmatpush1.msra.mxu0 %v481
    %1258 = vmatprep.subr.mxu0 0.0
    %1259 = vmatpush1.msra.mxu0 %v482
    %1260 = vmatprep.subr.mxu0 0.0
    %1261 = vmatpush1.msra.mxu0 %v483
    %1262 = vmatprep.subr.mxu0 0.0
    %1263 = vmatpush1.msra.mxu0 %v484
    %1264 = vmatprep.subr.mxu0 0.0
    %1265 = vmatpush1.msra.mxu0 %v485
    %1266 = vmatprep.subr.mxu0 0.0
    %1267 = vmatpush1.msra.mxu0 %v486
    %1268 = vmatprep.subr.mxu0 0.0
    %1269 = vmatpush1.msra.mxu0 %v487
    %1270 = vmatprep.subr.mxu0 0.0
    %1271 = vmatpush1.msra.mxu0 %v488
    %1272 = vmatprep.subr.mxu0 0.0
    %1273 = vmatpush1.msra.mxu0 %v489
    %1274 = vmatprep.subr.mxu0 0.0
    %1275 = vmatpush1.msra.mxu0 %v490
    %1276 = vmatprep.subr.mxu0 0.0
    %1277 = vmatpush1.msra.mxu0 %v491
    %1278 = vmatprep.subr.mxu0 0.0
    %1279 = vmatpush1.msra.mxu0 %v492
    %1280 = vmatprep.subr.mxu0 0.0
    %1281 = vmatpush1.msra.mxu0 %v493
    %1282 = vmatprep.subr.mxu0 0.0
    %1283 = vmatpush1.msra.mxu0 %v494
    %1284 = vmatprep.subr.mxu0 0.0
    %1285 = vmatpush1.msra.mxu0 %v495
    %1286 = vmatprep.subr.mxu0 0.0
    %1287 = vmatpush1.msra.mxu0 %v496
    %1288 = vmatprep.subr.mxu0 0.0
    %1289 = vmatpush1.msra.mxu0 %v497
    %1290 = vmatprep.subr.mxu0 0.0
    %1291 = vmatpush1.msra.mxu0 %v498
    %1292 = vmatprep.subr.mxu0 0.0
    %1293 = vmatpush1.msra.mxu0 %v499
    %1294 = vmatprep.subr.mxu0 0.0
    %1295 = vmatpush1.msra.mxu0 %v500
    %1296 = vmatprep.subr.mxu0 0.0
    %1297 = vmatpush1.msra.mxu0 %v501
    %1298 = vmatprep.subr.mxu0 0.0
    %1299 = vmatpush1.msra.mxu0 %v502
    %1300 = vmatprep.subr.mxu0 0.0
    %1301 = vmatpush1.msra.mxu0 %v503
    %1302 = vmatprep.subr.mxu0 0.0
    %1303 = vmatpush1.msra.mxu0 %v504
    %1304 = vmatprep.subr.mxu0 0.0
    %1305 = vmatpush1.msra.mxu0 %v505
    %1306 = vmatprep.subr.mxu0 0.0
    %1307 = vmatpush1.msra.mxu0 %v506
    %1308 = vmatprep.subr.mxu0 0.0
    %1309 = vmatpush1.msra.mxu0 %v507
    %1310 = vmatprep.subr.mxu0 0.0
    %1311 = vmatpush1.msra.mxu0 %v508
    %1312 = vmatprep.mubr.f32.mxu0 %v154
    %1313 = vmatmul.mubr.f32.gmra.mrb[0].mxu0 %v153
    %v1314 = vpop.f32.mrb[0].mxu0
    %v1315 = vadd.f32 %v1245, %v1314
    %v1316 = vpop.f32.mrb[0].mxu0
    %1317 = vdwg.mxu0
    %1318 = vmatprep.subr.mxu0 0.0
    %1319 = vmatpush1.msra.mxu0 %v509
    %1320 = vmatprep.subr.mxu0 0.0
    %1321 = vmatpush1.msra.mxu0 %v510
    %1322 = vmatprep.subr.mxu0 0.0
    %1323 = vmatpush1.msra.mxu0 %v511
    %1324 = vmatprep.subr.mxu0 0.0
    %1325 = vmatpush1.msra.mxu0 %v512
    %1326 = vmatprep.subr.mxu0 0.0
    %1327 = vmatpush1.msra.mxu0 %v513
    %1328 = vmatprep.subr.mxu0 0.0
    %1329 = vmatpush1.msra.mxu0 %v514
    %1330 = vmatprep.subr.mxu0 0.0
    %1331 = vmatpush1.msra.mxu0 %v515
    %1332 = vmatprep.subr.mxu0 0.0
    %1333 = vmatpush1.msra.mxu0 %v516
    %1334 = vmatprep.subr.mxu0 0.0
    %1335 = vmatpush1.msra.mxu0 %v517
    %1336 = vmatprep.subr.mxu0 0.0
    %1337 = vmatpush1.msra.mxu0 %v518
    %1338 = vmatprep.subr.mxu0 0.0
    %1339 = vmatpush1.msra.mxu0 %v519
    %1340 = vmatprep.subr.mxu0 0.0
    %1341 = vmatpush1.msra.mxu0 %v520
    %1342 = vmatprep.subr.mxu0 0.0
    %1343 = vmatpush1.msra.mxu0 %v521
    %1344 = vmatprep.subr.mxu0 0.0
    %1345 = vmatpush1.msra.mxu0 %v522
    %1346 = vmatprep.subr.mxu0 0.0
    %1347 = vmatpush1.msra.mxu0 %v523
    %1348 = vmatprep.subr.mxu0 0.0
    %1349 = vmatpush1.msra.mxu0 %v524
    %1350 = vmatprep.subr.mxu0 0.0
    %1351 = vmatpush1.msra.mxu0 %v525
    %1352 = vmatprep.subr.mxu0 0.0
    %1353 = vmatpush1.msra.mxu0 %v526
    %1354 = vmatprep.subr.mxu0 0.0
    %1355 = vmatpush1.msra.mxu0 %v527
    %1356 = vmatprep.subr.mxu0 0.0
    %1357 = vmatpush1.msra.mxu0 %v528
    %1358 = vmatprep.subr.mxu0 0.0
    %1359 = vmatpush1.msra.mxu0 %v529
    %1360 = vmatprep.subr.mxu0 0.0
    %1361 = vmatpush1.msra.mxu0 %v530
    %1362 = vmatprep.subr.mxu0 0.0
    %1363 = vmatpush1.msra.mxu0 %v531
    %1364 = vmatprep.subr.mxu0 0.0
    %1365 = vmatpush1.msra.mxu0 %v532
    %1366 = vmatprep.subr.mxu0 0.0
    %1367 = vmatpush1.msra.mxu0 %v533
    %1368 = vmatprep.subr.mxu0 0.0
    %1369 = vmatpush1.msra.mxu0 %v534
    %1370 = vmatprep.subr.mxu0 0.0
    %1371 = vmatpush1.msra.mxu0 %v535
    %1372 = vmatprep.subr.mxu0 0.0
    %1373 = vmatpush1.msra.mxu0 %v536
    %1374 = vmatprep.subr.mxu0 0.0
    %1375 = vmatpush1.msra.mxu0 %v537
    %1376 = vmatprep.subr.mxu0 0.0
    %1377 = vmatpush1.msra.mxu0 %v538
    %1378 = vmatprep.subr.mxu0 0.0
    %1379 = vmatpush1.msra.mxu0 %v539
    %1380 = vmatprep.subr.mxu0 0.0
    %1381 = vmatpush1.msra.mxu0 %v540
    %1382 = vmatprep.mubr.f32.mxu0 %v156
    %1383 = vmatmul.mubr.f32.gmra.mrb[0].mxu0 %v155
    %v1384 = vpop.f32.mrb[0].mxu0
    %v1385 = vadd.f32 %v1315, %v1384
    %v1386 = vpop.f32.mrb[0].mxu0
    %1387 = vdwg.mxu0
    %v1388 = vmax.f32 %v1385, 0.0
    %v1389 = vld [vmem:[#allocation8] sm:$0xff]
    %v1390 = vld [vmem:[#allocation8 + $0x8] sm:$0xff]
    %v1391 = vld [vmem:[#allocation8 + $0x10] sm:$0xff]
    %v1392 = vld [vmem:[#allocation8 + $0x18] sm:$0xff]
    %v1393 = vld [vmem:[#allocation8 + $0x20] sm:$0xff]
    %v1394 = vld [vmem:[#allocation8 + $0x28] sm:$0xff]
    %v1395 = vld [vmem:[#allocation8 + $0x30] sm:$0xff]
    %v1396 = vld [vmem:[#allocation8 + $0x38] sm:$0xff]
    %v1397 = vld [vmem:[#allocation8 + $0x40] sm:$0xff]
    %v1398 = vld [vmem:[#allocation8 + $0x48] sm:$0xff]
    %v1399 = vld [vmem:[#allocation8 + $0x50] sm:$0xff]
    %v1400 = vld [vmem:[#allocation8 + $0x58] sm:$0xff]
    %v1401 = vld [vmem:[#allocation8 + $0x60] sm:$0xff]
    %v1402 = vld [vmem:[#allocation8 + $0x68] sm:$0xff]
    %v1403 = vld [vmem:[#allocation8 + $0x70] sm:$0xff]
    %v1404 = vld [vmem:[#allocation8 + $0x78] sm:$0xff]
    %v1405 = vld [vmem:[#allocation10] sm:$0x1]
    %v1407 = vlaneseq
    %v1408 = vshrl.u32 %v1407, 7
    %v1409 = vsub.s32 0, %v1408
    %v1410 = vrot.slane %v1405, %v1409
    %1412 = vmatprep.subr.mxu0 0.0
    %1413 = vmatpush1.msra.mxu0 %v1389
    %1414 = vmatprep.subr.mxu0 0.0
    %1415 = vmatpush1.msra.mxu0 %v1390
    %1416 = vmatprep.subr.mxu0 0.0
    %1417 = vmatpush1.msra.mxu0 %v1391
    %1418 = vmatprep.subr.mxu0 0.0
    %1419 = vmatpush1.msra.mxu0 %v1392
    %1420 = vmatprep.subr.mxu0 0.0
    %1421 = vmatpush1.msra.mxu0 %v1393
    %1422 = vmatprep.subr.mxu0 0.0
    %1423 = vmatpush1.msra.mxu0 %v1394
    %1424 = vmatprep.subr.mxu0 0.0
    %1425 = vmatpush1.msra.mxu0 %v1395
    %1426 = vmatprep.subr.mxu0 0.0
    %1427 = vmatpush1.msra.mxu0 %v1396
    %1428 = vmatprep.subr.mxu0 0.0
    %1429 = vmatpush1.msra.mxu0 %v1397
    %1430 = vmatprep.subr.mxu0 0.0
    %1431 = vmatpush1.msra.mxu0 %v1398
    %1432 = vmatprep.subr.mxu0 0.0
    %1433 = vmatpush1.msra.mxu0 %v1399
    %1434 = vmatprep.subr.mxu0 0.0
    %1435 = vmatpush1.msra.mxu0 %v1400
    %1436 = vmatprep.subr.mxu0 0.0
    %1437 = vmatpush1.msra.mxu0 %v1401
    %1438 = vmatprep.subr.mxu0 0.0
    %1439 = vmatpush1.msra.mxu0 %v1402
    %1440 = vmatprep.subr.mxu0 0.0
    %1441 = vmatpush1.msra.mxu0 %v1403
    %1442 = vmatprep.subr.mxu0 0.0
    %1443 = vmatpush1.msra.mxu0 %v1404
    %1444 = vmatprep.subr.mxu0 0.0
    %1445 = vmatpush1.msra.mxu0 0.0
    %1446 = vmatprep.subr.mxu0 0.0
    %1447 = vmatpush1.msra.mxu0 0.0
    %1448 = vmatprep.subr.mxu0 0.0
    %1449 = vmatpush1.msra.mxu0 0.0
    %1450 = vmatprep.subr.mxu0 0.0
    %1451 = vmatpush1.msra.mxu0 0.0
    %1452 = vmatprep.subr.mxu0 0.0
    %1453 = vmatpush1.msra.mxu0 0.0
    %1454 = vmatprep.subr.mxu0 0.0
    %1455 = vmatpush1.msra.mxu0 0.0
    %1456 = vmatprep.subr.mxu0 0.0
    %1457 = vmatpush1.msra.mxu0 0.0
    %1458 = vmatprep.subr.mxu0 0.0
    %1459 = vmatpush1.msra.mxu0 0.0
    %1460 = vmatprep.subr.mxu0 0.0
    %1461 = vmatpush1.msra.mxu0 0.0
    %1462 = vmatprep.subr.mxu0 0.0
    %1463 = vmatpush1.msra.mxu0 0.0
    %1464 = vmatprep.subr.mxu0 0.0
    %1465 = vmatpush1.msra.mxu0 0.0
    %1466 = vmatprep.subr.mxu0 0.0
    %1467 = vmatpush1.msra.mxu0 0.0
    %1468 = vmatprep.subr.mxu0 0.0
    %1469 = vmatpush1.msra.mxu0 0.0
    %1470 = vmatprep.subr.mxu0 0.0
    %1471 = vmatpush1.msra.mxu0 0.0
    %1472 = vmatprep.subr.mxu0 0.0
    %1473 = vmatpush1.msra.mxu0 0.0
    %1474 = vmatprep.subr.mxu0 0.0
    %1475 = vmatpush1.msra.mxu0 0.0
    %1476 = vmatprep.mubr.f32.mxu0 0.0
    %1477 = vmatmul.mubr.f32.gmra.mrb[0].mxu0 %v1388
    %v1478 = vpop.f32.mrb[0].mxu0
    %v1479 = vadd.f32 %v1410, %v1478
    %v1480 = vpop.f32.mrb[0].mxu0
    %1481 = vdwg.mxu0
    %v1482 = vmax.f32 %v1479, 0.0
    %v1483 = vld [vmem:[#allocation11] sm:$0xff]
    %v1484 = vld [vmem:[#allocation11 + $0x8] sm:$0xff]
    %v1485 = vld [vmem:[#allocation11 + $0x10] sm:$0xff]
    %v1486 = vld [vmem:[#allocation11 + $0x18] sm:$0xff]
    %v1487 = vld [vmem:[#allocation11 + $0x20] sm:$0xff]
    %v1488 = vld [vmem:[#allocation11 + $0x28] sm:$0xff]
    %v1489 = vld [vmem:[#allocation11 + $0x30] sm:$0xff]
    %v1490 = vld [vmem:[#allocation11 + $0x38] sm:$0xff]
    %v1491 = vld [vmem:[#allocation11 + $0x40] sm:$0xff]
    %v1492 = vld [vmem:[#allocation11 + $0x48] sm:$0xff]
    %v1493 = vld [vmem:[#allocation11 + $0x50] sm:$0xff]
    %v1494 = vld [vmem:[#allocation11 + $0x58] sm:$0xff]
    %v1495 = vld [vmem:[#allocation11 + $0x60] sm:$0xff]
    %v1496 = vld [vmem:[#allocation11 + $0x68] sm:$0xff]
    %v1497 = vld [vmem:[#allocation11 + $0x70] sm:$0xff]
    %v1498 = vld [vmem:[#allocation11 + $0x78] sm:$0xff]
    %v1499 = vld [vmem:[#allocation13] sm:$0x1]
    %v1501 = vlaneseq
    %v1502 = vshrl.u32 %v1501, 7
    %v1503 = vsub.s32 0, %v1502
    %v1504 = vrot.slane %v1499, %v1503
    %1506 = vmatprep.subr.mxu0 0.0
    %1507 = vmatpush1.msra.mxu0 %v1483
    %1508 = vmatprep.subr.mxu0 0.0
    %1509 = vmatpush1.msra.mxu0 %v1484
    %1510 = vmatprep.subr.mxu0 0.0
    %1511 = vmatpush1.msra.mxu0 %v1485
    %1512 = vmatprep.subr.mxu0 0.0
    %1513 = vmatpush1.msra.mxu0 %v1486
    %1514 = vmatprep.subr.mxu0 0.0
    %1515 = vmatpush1.msra.mxu0 %v1487
    %1516 = vmatprep.subr.mxu0 0.0
    %1517 = vmatpush1.msra.mxu0 %v1488
    %1518 = vmatprep.subr.mxu0 0.0
    %1519 = vmatpush1.msra.mxu0 %v1489
    %1520 = vmatprep.subr.mxu0 0.0
    %1521 = vmatpush1.msra.mxu0 %v1490
    %1522 = vmatprep.subr.mxu0 0.0
    %1523 = vmatpush1.msra.mxu0 %v1491
    %1524 = vmatprep.subr.mxu0 0.0
    %1525 = vmatpush1.msra.mxu0 %v1492
    %1526 = vmatprep.subr.mxu0 0.0
    %1527 = vmatpush1.msra.mxu0 %v1493
    %1528 = vmatprep.subr.mxu0 0.0
    %1529 = vmatpush1.msra.mxu0 %v1494
    %1530 = vmatprep.subr.mxu0 0.0
    %1531 = vmatpush1.msra.mxu0 %v1495
    %1532 = vmatprep.subr.mxu0 0.0
    %1533 = vmatpush1.msra.mxu0 %v1496
    %1534 = vmatprep.subr.mxu0 0.0
    %1535 = vmatpush1.msra.mxu0 %v1497
    %1536 = vmatprep.subr.mxu0 0.0
    %1537 = vmatpush1.msra.mxu0 %v1498
    %1538 = vmatprep.subr.mxu0 0.0
    %1539 = vmatpush1.msra.mxu0 0.0
    %1540 = vmatprep.subr.mxu0 0.0
    %1541 = vmatpush1.msra.mxu0 0.0
    %1542 = vmatprep.subr.mxu0 0.0
    %1543 = vmatpush1.msra.mxu0 0.0
    %1544 = vmatprep.subr.mxu0 0.0
    %1545 = vmatpush1.msra.mxu0 0.0
    %1546 = vmatprep.subr.mxu0 0.0
    %1547 = vmatpush1.msra.mxu0 0.0
    %1548 = vmatprep.subr.mxu0 0.0
    %1549 = vmatpush1.msra.mxu0 0.0
    %1550 = vmatprep.subr.mxu0 0.0
    %1551 = vmatpush1.msra.mxu0 0.0
    %1552 = vmatprep.subr.mxu0 0.0
    %1553 = vmatpush1.msra.mxu0 0.0
    %1554 = vmatprep.subr.mxu0 0.0
    %1555 = vmatpush1.msra.mxu0 0.0
    %1556 = vmatprep.subr.mxu0 0.0
    %1557 = vmatpush1.msra.mxu0 0.0
    %1558 = vmatprep.subr.mxu0 0.0
    %1559 = vmatpush1.msra.mxu0 0.0
    %1560 = vmatprep.subr.mxu0 0.0
    %1561 = vmatpush1.msra.mxu0 0.0
    %1562 = vmatprep.subr.mxu0 0.0
    %1563 = vmatpush1.msra.mxu0 0.0
    %1564 = vmatprep.subr.mxu0 0.0
    %1565 = vmatpush1.msra.mxu0 0.0
    %1566 = vmatprep.subr.mxu0 0.0
    %1567 = vmatpush1.msra.mxu0 0.0
    %1568 = vmatprep.subr.mxu0 0.0
    %1569 = vmatpush1.msra.mxu0 0.0
    %1570 = vmatprep.mubr.f32.mxu0 0.0
    %1571 = vmatmul.mubr.f32.gmra.mrb[0].mxu0 %v1482
    %v1572 = vpop.f32.mrb[0].mxu0
    %v1573 = vadd.f32 %v1504, %v1572
    %v1574 = vpop.f32.mrb[0].mxu0
    %1575 = vdwg.mxu0
    %v1576 = vmax.f32 %v1573, 0.0
    %v1577 = vld [vmem:[#allocation14] sm:$0x1]
    %v1579 = vlaneseq
    %v1580 = vshrl.u32 %v1579, 7
    %v1581 = vsub.s32 0, %v1580
    %v1582 = vrot.slane %v1577, %v1581
    %v1584 = vmul.f32 %v1576, %v1582
    %1585 = vadd.xlane.f32.xlu0 %v1584
    %v1586 = vpop.xlane.xlu0 %1585
    %v1587 = vld [vmem:[#allocation2] sm:$0x1]
    %v1589 = vlaneseq
    %v1590 = vshrl.u32 %v1589, 7
    %v1591 = vsub.s32 0, %v1590
    %v1592 = vrot.slane %v1587, %v1591
    %v1594 = vadd.f32 %v1586, %v1592
    %vm1595 = vcmask 7168
    %1596 = vst.msk [vmem:[%s9] sm:$0xff] %vm1595, %v1594
    // Predicated region
    $region70: #{tpu_custom_call.1} parent=1 // pred_check
      _
    $region71: #{tpu_custom_call.1} parent=1 // pred_check_branch
      %1598 = sbr.rel (0) target = $region73
    $region72: #{tpu_custom_call.1} parent=1 // pred_region
      _
    $region73: #{tpu_custom_call.1} parent=1 // pred_fallthru
      _
    // Predicated region
    $region74: #{tpu_custom_call.1} parent=1 // pred_check
      _
    $region75: #{tpu_custom_call.1} parent=1 // pred_check_branch
      %1600 = sbr.rel (0) target = $region77
    $region76: #{tpu_custom_call.1} parent=1 // pred_region
      _
    $region77: #{tpu_custom_call.1} parent=1 // pred_fallthru
      _
    %1601 = vsyncpa [#allocation4], 1
    %1602 = vsyncpa [#allocation6], 1
    %1603 = vsyncpa [#allocation9], 1
    %1604 = vsyncpa [#allocation12], 1
    %1605 = vsyncpa [#allocation15], 1

</llo_original>
